<compile_context>
chip_gen: v5e
topology: v5e:2x2
jax: 0.10.0
libtpu: 0.0.40
codegen_flags: <defaults>
</compile_context>

<pallas_src>
import jax
import jax.numpy as jnp
from jax.experimental import pallas as pl
from jax.experimental.pallas import tpu as pltpu

EPS = 1e-6


def _round_up(x: int, m: int) -> int:
    return ((x + m - 1) // m) * m


def sublayer_connection_kernel(x_ref, w_ref, bias_ref, a2_ref, b2_ref, o_ref):
    x = x_ref[...].astype(jnp.float32)                        # [T, D]
    d = x.shape[-1]

    # ---- LayerNorm stats in one pass: both cross-lane reductions issue back-to-back
    # on the same loaded vregs (less XLU dependency stall, one fewer [T,D] temporary).
    s = jnp.sum(x, axis=-1, keepdims=True)                    # [T, 1]
    ss = jnp.sum(x * x, axis=-1, keepdims=True)               # [T, 1]
    mean = s * (1.0 / d)
    var_unbiased = jnp.maximum(ss - d * mean * mean, 0.0) / (d - 1)   # ddof=1
    std = jnp.sqrt(var_unbiased)

    # Per-row reciprocal on [T,1] (EUP) instead of a full [T,D] VPU divide.
    inv = pl.reciprocal(std + EPS, approx=False)              # [T, 1]
    centered = x - mean
    normed = centered * inv * a2_ref[...] + b2_ref[...]       # [T, D]

    # ---- sublayer = Linear(D, D) on the MXU.
    # Operands are fed in the weight's dtype (pass bf16 W for the fast MXU path on
    # v5e/v6e/v7x); accumulation stays f32 via preferred_element_type.
    y = jnp.dot(normed.astype(w_ref.dtype), w_ref[...],
                preferred_element_type=jnp.float32) + bias_ref[...]

    # dropout (eval mode) is identity; residual add.
    o_ref[...] = (x + y).astype(o_ref.dtype)


def sublayer_connection(x, w, bias, a2, b2, *, tile_n=256):
    """x: [B, S, D]; w: [D, D]; bias/a2/b2: [D].

    Rows (B*S) are tiled with TILE_N (multiple of 8, 128-aligned tiles preferred);
    D should be a multiple of 128 for lane-dense stores / full MXU columns.
    """
    B, S, D = x.shape
    N = B * S

    # Row tile: multiple of 8 sublanes, capped at (padded) N.
    tile_n = max(8, min(_round_up(tile_n, 8), _round_up(N, 8)))
    n_pad = _round_up(N, tile_n)
    grid_n = n_pad // tile_n

    x2d = x.reshape(N, D)
    if n_pad != N:
        x2d = jnp.pad(x2d, ((0, n_pad - N), (0, 0)))
    bias2d = bias.reshape(1, D)
    a2d = a2.reshape(1, D)
    b2d = b2.reshape(1, D)

    # VMEM budget: double-buffered x/out tiles + resident W + f32 temporaries, with headroom,
    # clamped so it also fits v7x's 64 MiB physical VMEM.
    x_bytes = jnp.dtype(x2d.dtype).itemsize
    w_bytes = jnp.dtype(w.dtype).itemsize
    need = (2 * tile_n * D * x_bytes          # x tile, 2-deep
            + 2 * tile_n * D * x_bytes        # out tile, 2-deep
            + 2 * D * D * w_bytes             # resident weight
            + 8 * D * 4                       # bias / a2 / b2
            + 6 * tile_n * D * 4)             # f32 temporaries headroom
    vmem_limit = int(min(max(2 * need, 16 * 1024 * 1024), 48 * 1024 * 1024))

    out2d = pl.pallas_call(
        sublayer_connection_kernel,
        out_shape=jax.ShapeDtypeStruct((n_pad, D), x.dtype),
        grid=(grid_n,),
        in_specs=[
            pl.BlockSpec((tile_n, D), lambda i: (i, 0)),   # streamed activations
            pl.BlockSpec((D, D), lambda i: (0, 0)),        # resident weight
            pl.BlockSpec((1, D), lambda i: (0, 0)),        # resident bias
            pl.BlockSpec((1, D), lambda i: (0, 0)),        # resident a_2
            pl.BlockSpec((1, D), lambda i: (0, 0)),        # resident b_2
        ],
        out_specs=pl.BlockSpec((tile_n, D), lambda i: (i, 0)),
        compiler_params=pltpu.CompilerParams(
            dimension_semantics=("parallel",),             # megacore-shardable row axis
            vmem_limit_bytes=vmem_limit),
    )(x2d, w, bias2d, a2d, b2d)

    if n_pad != N:
        out2d = out2d[:N]
    return out2d.reshape(B, S, D)


def reference(x, w, bias, a2, b2):
    xf = x.astype(jnp.float32)
    mean = jnp.mean(xf, axis=-1, keepdims=True)
    var = jnp.sum((xf - mean) ** 2, axis=-1, keepdims=True) / (xf.shape[-1] - 1)
    std = jnp.sqrt(var)
    normed = a2 * (xf - mean) / (std + EPS) + b2
    y = normed @ w.astype(jnp.float32) + bias
    return (xf + y).astype(x.dtype)


if __name__ == "__main__":
    key = jax.random.PRNGKey(0)
    # Small but lane-dense shapes: D = 128 (one full lane tile); N = 384 rows exercises
    # a 2-step grid with row padding (tile_n = 256 -> padded to 512).
    B, S, D = 2, 192, 128

    kx, kw, kb = jax.random.split(key, 3)
    x = jax.random.normal(kx, (B, S, D), dtype=jnp.float32)

    # LayerNorm params as in module __init__: a_2 = ones, b_2 = zeros.
    a2 = jnp.ones((D,), dtype=jnp.float32)
    b2 = jnp.zeros((D,), dtype=jnp.float32)
    # Sublayer Linear(D, D) weights (deterministic synthetic init).
    w = jax.random.normal(kw, (D, D), dtype=jnp.float32) * 0.05
    bias = jax.random.normal(kb, (D,), dtype=jnp.float32) * 0.05

    out = sublayer_connection(x, w, bias, a2, b2, tile_n=256)
    out = jax.block_until_ready(out)

    ref = reference(x, w, bias, a2, b2)
    assert out.shape == (B, S, D)
    assert jnp.allclose(out, ref, atol=5e-4, rtol=5e-4), "mismatch vs reference"
    print("KERNEL_OK")
</pallas_src>

<mosaic_0001>
module attributes {stable_mosaic.version = 11 : i64} {
  func.func @sublayer_connection_kernel(%arg0: i32, %arg1: memref<256x128xf32, #tpu.memory_space<vmem>>, %arg2: memref<128x128xf32, #tpu.memory_space<vmem>>, %arg3: memref<1x128xf32, #tpu.memory_space<vmem>>, %arg4: memref<1x128xf32, #tpu.memory_space<vmem>>, %arg5: memref<1x128xf32, #tpu.memory_space<vmem>>, %arg6: memref<256x128xf32, #tpu.memory_space<vmem>>) attributes {dimension_semantics = [#tpu.dimension_semantics<parallel>], iteration_bounds = array<i64: 2>, scalar_prefetch = 0 : i64, scratch_operands = 0 : i64, tpu.core_type = #tpu.core_type<tc>, window_params = [{transform_indices = @transform_0, window_bounds = array<i64: 256, 128>}, {pipeline_mode = #tpu.pipeline_mode<synchronous>, transform_indices = @transform_1, window_bounds = array<i64: 128, 128>}, {pipeline_mode = #tpu.pipeline_mode<synchronous>, transform_indices = @transform_2, window_bounds = array<i64: 1, 128>}, {pipeline_mode = #tpu.pipeline_mode<synchronous>, transform_indices = @transform_3, window_bounds = array<i64: 1, 128>}, {pipeline_mode = #tpu.pipeline_mode<synchronous>, transform_indices = @transform_4, window_bounds = array<i64: 1, 128>}, {transform_indices = @transform_5, window_bounds = array<i64: 256, 128>}]} {
    %c0 = arith.constant 0 : index
    %c0_0 = arith.constant 0 : index
    %0 = vector.load %arg1[%c0, %c0_0] : memref<256x128xf32, #tpu.memory_space<vmem>>, vector<256x128xf32>
    %cst = arith.constant dense<0.000000e+00> : vector<256xf32>
    %1 = vector.multi_reduction <add>, %0, %cst [1] : vector<256x128xf32> to vector<256xf32>
    %2 = vector.shape_cast %1 : vector<256xf32> to vector<256x1xf32>
    %3 = arith.mulf %0, %0 : vector<256x128xf32>
    %cst_1 = arith.constant dense<0.000000e+00> : vector<256xf32>
    %4 = vector.multi_reduction <add>, %3, %cst_1 [1] : vector<256x128xf32> to vector<256xf32>
    %5 = vector.shape_cast %4 : vector<256xf32> to vector<256x1xf32>
    %cst_2 = arith.constant 7.812500e-03 : f32
    %6 = vector.broadcast %cst_2 : f32 to vector<256x1xf32>
    %7 = arith.mulf %2, %6 : vector<256x1xf32>
    %cst_3 = arith.constant 1.280000e+02 : f32
    %8 = vector.broadcast %cst_3 : f32 to vector<256x1xf32>
    %9 = arith.mulf %8, %7 : vector<256x1xf32>
    %10 = arith.mulf %9, %7 : vector<256x1xf32>
    %11 = arith.subf %5, %10 : vector<256x1xf32>
    %cst_4 = arith.constant 0.000000e+00 : f32
    %12 = vector.broadcast %cst_4 : f32 to vector<256x1xf32>
    %13 = arith.maximumf %11, %12 : vector<256x1xf32>
    %cst_5 = arith.constant 1.270000e+02 : f32
    %14 = vector.broadcast %cst_5 : f32 to vector<256x1xf32>
    %15 = arith.divf %13, %14 : vector<256x1xf32>
    %16 = math.sqrt %15 : vector<256x1xf32>
    %cst_6 = arith.constant 9.99999997E-7 : f32
    %17 = vector.broadcast %cst_6 : f32 to vector<256x1xf32>
    %18 = arith.addf %16, %17 : vector<256x1xf32>
    %19 = tpu.reciprocal %18 : vector<256x1xf32> -> vector<256x1xf32>
    %20 = vector.broadcast %7 : vector<256x1xf32> to vector<256x128xf32>
    %21 = arith.subf %0, %20 : vector<256x128xf32>
    %22 = vector.broadcast %19 : vector<256x1xf32> to vector<256x128xf32>
    %23 = arith.mulf %21, %22 : vector<256x128xf32>
    %c0_7 = arith.constant 0 : index
    %c0_8 = arith.constant 0 : index
    %24 = vector.load %arg4[%c0_7, %c0_8] : memref<1x128xf32, #tpu.memory_space<vmem>>, vector<1x128xf32>
    %25 = vector.broadcast %24 : vector<1x128xf32> to vector<256x128xf32>
    %26 = arith.mulf %23, %25 : vector<256x128xf32>
    %c0_9 = arith.constant 0 : index
    %c0_10 = arith.constant 0 : index
    %27 = vector.load %arg5[%c0_9, %c0_10] : memref<1x128xf32, #tpu.memory_space<vmem>>, vector<1x128xf32>
    %28 = vector.broadcast %27 : vector<1x128xf32> to vector<256x128xf32>
    %29 = arith.addf %26, %28 : vector<256x128xf32>
    %c0_11 = arith.constant 0 : index
    %c0_12 = arith.constant 0 : index
    %30 = vector.load %arg2[%c0_11, %c0_12] : memref<128x128xf32, #tpu.memory_space<vmem>>, vector<128x128xf32>
    %cst_13 = arith.constant dense<0.000000e+00> : vector<256x128xf32>
    %31 = tpu.matmul %29, %30, %cst_13 {dimension_numbers = #tpu.dot_dimension_numbers<[1], [0], [0], [1], [0, 0, 1, 1], [], []>} : vector<256x128xf32>, vector<128x128xf32>, vector<256x128xf32> -> vector<256x128xf32>
    %c0_14 = arith.constant 0 : index
    %c0_15 = arith.constant 0 : index
    %32 = vector.load %arg3[%c0_14, %c0_15] : memref<1x128xf32, #tpu.memory_space<vmem>>, vector<1x128xf32>
    %33 = vector.broadcast %32 : vector<1x128xf32> to vector<256x128xf32>
    %34 = arith.addf %31, %33 : vector<256x128xf32>
    %35 = arith.addf %0, %34 : vector<256x128xf32>
    %c0_16 = arith.constant 0 : index
    %c0_17 = arith.constant 0 : index
    %36 = vector.load %arg6[%c0_16, %c0_17] : memref<256x128xf32, #tpu.memory_space<vmem>>, vector<256x128xf32>
    tpu.vector_store %arg6[%c0_16, %c0_17], %35 {strides = array<i32>} : memref<256x128xf32, #tpu.memory_space<vmem>>, vector<256x128xf32>,
    return
  }
  func.func @transform_0(%arg0: i32) -> (i32, i32) {
    %c0_i32 = arith.constant 0 : i32
    %c0_i32_0 = arith.constant 0 : i32
    return %arg0, %c0_i32 : i32, i32
  }
  func.func @transform_1(%arg0: i32) -> (i32, i32) {
    %c0_i32 = arith.constant 0 : i32
    %c0_i32_0 = arith.constant 0 : i32
    %c0_i32_1 = arith.constant 0 : i32
    return %c0_i32, %c0_i32_0 : i32, i32
  }
  func.func @transform_2(%arg0: i32) -> (i32, i32) {
    %c0_i32 = arith.constant 0 : i32
    %c0_i32_0 = arith.constant 0 : i32
    %c0_i32_1 = arith.constant 0 : i32
    return %c0_i32, %c0_i32_0 : i32, i32
  }
  func.func @transform_3(%arg0: i32) -> (i32, i32) {
    %c0_i32 = arith.constant 0 : i32
    %c0_i32_0 = arith.constant 0 : i32
    %c0_i32_1 = arith.constant 0 : i32
    return %c0_i32, %c0_i32_0 : i32, i32
  }
  func.func @transform_4(%arg0: i32) -> (i32, i32) {
    %c0_i32 = arith.constant 0 : i32
    %c0_i32_0 = arith.constant 0 : i32
    %c0_i32_1 = arith.constant 0 : i32
    return %c0_i32, %c0_i32_0 : i32, i32
  }
  func.func @transform_5(%arg0: i32) -> (i32, i32) {
    %c0_i32 = arith.constant 0 : i32
    %c0_i32_0 = arith.constant 0 : i32
    return %arg0, %c0_i32 : i32, i32
  }
}

</mosaic_0001>

<llo_original>
// kernel: tpu_custom_call.1
$region0: #{tpu_custom_call.1}
  #allocation0 [shape = 'u32[]', space=smem, size = 0x4, offset = 0x4, fixed_abs, tag = 'smem constant byte address 0x4 - core index']
  #allocation1 [shape = 'u32[72,128]{1,0:T(1,128)}', space=vmem, size = 0x9000, scoped, tag = 'internal scratch']
  %s0 = inlined_call_operand.hbm [shape: f32[512,128], index: 0, kind: input, shape index: {}]
  %s1 = inlined_call_operand.hbm [shape: f32[128,128], index: 1, kind: input, shape index: {}]
  %s2 = inlined_call_operand.vmem [shape: f32[1,128], index: 2, kind: input, shape index: {}]
  %s3 = inlined_call_operand.vmem [shape: f32[1,128], index: 3, kind: input, shape index: {}]
  %s4 = inlined_call_operand.vmem [shape: f32[1,128], index: 4, kind: input, shape index: {}]
  %s5 = inlined_call_operand.hbm [shape: f32[512,128], index: 5, kind: output, shape index: {}]
  %s6 = sld [smem:[#allocation0]]
  $region61: #{tpu_custom_call.1} parent=0
    _
  %s8 = ssub.s32 1, %s6
  %s9 = scalar_select 0, %s8, %s6
  $region1: #{tpu_custom_call.1} parent=0
    #allocation2 [shape = 'u8[262144]{0}', space=vmem, size = 0x40000, scoped, tag = 'input window, operand 0']
    #allocation3 [shape = 's32[2]{0}', space=sflag, size = 0x8, scoped, tag = 'scoped memory for tpu_custom_call.1']
    #allocation4 [shape = 's32[2]{0}', space=sflag, size = 0x8, scoped, tag = 'scoped memory for tpu_custom_call.1']
    #allocation5 [shape = 'u8[65536]{0}', space=vmem, size = 0x10000, scoped, tag = 'input window, operand 1, single buffered']
    #allocation6 [shape = 's32[1]{0}', space=sflag, size = 0x4, scoped, tag = 'scoped memory for tpu_custom_call.1']
    #allocation7 [shape = 'u8[262144]{0}', space=vmem, size = 0x40000, scoped, tag = 'output window, operand 0']
    %10 = vsyncpa [#allocation3], 0
    %s11 = scalar_lea.sflag [#allocation3], 1
    %12 = vsyncpa %s11, 0
    %13 = vsyncpa [#allocation6], 0
    %14 = vsyncpa [#allocation4], 0
    %s15 = scalar_lea.sflag [#allocation4], 1
    %16 = vsyncpa %s15, 0
    loop: start=0, step=1, limit=4
    $region2: #{tpu_custom_call.1} parent=1 // loop_pre_header
      _
    $region3: #{tpu_custom_call.1} parent=1 // loop_header
      %s18 = sphi 0, %s22
      %p19 = scmp.ge.s32.totalorder %s18, 4
      %s28 = sphi 0, %s30
      %s31 = sphi 0, %s28
      %s32 = sphi 0, %s31
      %s48 = sphi 0, %s32
      %s52 = sphi 0, %s52
      %s54 = sphi 0, %s52
      %s55 = sphi 0, %s54
      %s69 = sphi 0, %s55
      %s73 = sphi 0, %s73
      %s75 = sphi 0, %s73
      %s76 = sphi 0, %s75
      %s90 = sphi 0, %s76
      %s94 = sphi 0, %s94
      %s96 = sphi 0, %s94
      %s97 = sphi 0, %s96
      %s111 = sphi 0, %s97
      %s115 = sphi 0, %s115
      %s117 = sphi 0, %s115
      %s118 = sphi 0, %s117
      %s132 = sphi 0, %s118
      %s138 = sphi 0, %s140
      %s141 = sphi 0, %s138
      %s142 = sphi 0, %s141
      %s158 = sphi 0, %s142
    $region4: #{tpu_custom_call.1} parent=1 // loop_header_branch
      %21 = sbr.rel (%p19) target = $region8
    $region5: #{tpu_custom_call.1} parent=1 // loop_body
      %s23 = ssub.s32 %s18, 1
      %s24 = ssub.s32 %s18, 2
      %s25 = sadd.s32 %s18, 1
      %s26 = ssub.s32 %s18, %s25
      %p27 = scmp.eq.s32.totalorder %s26, 0
      %s29 = sadd.s32 %s28, 1
      %s30 = scalar_select %p27, %s28, %s29
      %p33 = pneg %p27
      %p34 = scmp.eq.s32.totalorder %s18, 1
      %p35 = por %p33, %p34
      %p36 = scmp.ne.s32.totalorder %s28, %s31
      %p37 = scmp.eq.s32.totalorder %s18, 0
      %p38 = por %p36, %p37
      %p39 = scmp.ne.s32.totalorder %s28, %s31
      %p40 = scmp.eq.s32.totalorder %s23, 1
      %p41 = por %p39, %p40
      %p42 = scmp.ne.s32.totalorder %s31, %s32
      %p43 = scmp.eq.s32.totalorder %s23, 0
      %p44 = por %p42, %p43
      %p45 = scmp.ne.s32.totalorder %s31, %s32
      %p46 = scmp.eq.s32.totalorder %s24, 1
      %p47 = por %p45, %p46
      %p49 = scmp.ne.s32.totalorder %s32, %s48
      %p50 = scmp.eq.s32.totalorder %s24, 0
      %p51 = por %p49, %p50
      %s53 = sadd.s32 %s52, 1
      %p56 = scmp.eq.s32.totalorder %s18, 1
      %p57 = scmp.ne.s32.totalorder %s52, %s54
      %p58 = scmp.eq.s32.totalorder %s18, 0
      %p59 = por %p57, %p58
      %p60 = scmp.ne.s32.totalorder %s52, %s54
      %p61 = scmp.eq.s32.totalorder %s23, 1
      %p62 = por %p60, %p61
      %p63 = scmp.ne.s32.totalorder %s54, %s55
      %p64 = scmp.eq.s32.totalorder %s23, 0
      %p65 = por %p63, %p64
      %p66 = scmp.ne.s32.totalorder %s54, %s55
      %p67 = scmp.eq.s32.totalorder %s24, 1
      %p68 = por %p66, %p67
      %p70 = scmp.ne.s32.totalorder %s55, %s69
      %p71 = scmp.eq.s32.totalorder %s24, 0
      %p72 = por %p70, %p71
      %s74 = sadd.s32 %s73, 1
      %p77 = scmp.eq.s32.totalorder %s18, 1
      %p78 = scmp.ne.s32.totalorder %s73, %s75
      %p79 = scmp.eq.s32.totalorder %s18, 0
      %p80 = por %p78, %p79
      %p81 = scmp.ne.s32.totalorder %s73, %s75
      %p82 = scmp.eq.s32.totalorder %s23, 1
      %p83 = por %p81, %p82
      %p84 = scmp.ne.s32.totalorder %s75, %s76
      %p85 = scmp.eq.s32.totalorder %s23, 0
      %p86 = por %p84, %p85
      %p87 = scmp.ne.s32.totalorder %s75, %s76
      %p88 = scmp.eq.s32.totalorder %s24, 1
      %p89 = por %p87, %p88
      %p91 = scmp.ne.s32.totalorder %s76, %s90
      %p92 = scmp.eq.s32.totalorder %s24, 0
      %p93 = por %p91, %p92
      %s95 = sadd.s32 %s94, 1
      %p98 = scmp.eq.s32.totalorder %s18, 1
      %p99 = scmp.ne.s32.totalorder %s94, %s96
      %p100 = scmp.eq.s32.totalorder %s18, 0
      %p101 = por %p99, %p100
      %p102 = scmp.ne.s32.totalorder %s94, %s96
      %p103 = scmp.eq.s32.totalorder %s23, 1
      %p104 = por %p102, %p103
      %p105 = scmp.ne.s32.totalorder %s96, %s97
      %p106 = scmp.eq.s32.totalorder %s23, 0
      %p107 = por %p105, %p106
      %p108 = scmp.ne.s32.totalorder %s96, %s97
      %p109 = scmp.eq.s32.totalorder %s24, 1
      %p110 = por %p108, %p109
      %p112 = scmp.ne.s32.totalorder %s97, %s111
      %p113 = scmp.eq.s32.totalorder %s24, 0
      %p114 = por %p112, %p113
      %s116 = sadd.s32 %s115, 1
      %p119 = scmp.eq.s32.totalorder %s18, 1
      %p120 = scmp.ne.s32.totalorder %s115, %s117
      %p121 = scmp.eq.s32.totalorder %s18, 0
      %p122 = por %p120, %p121
      %p123 = scmp.ne.s32.totalorder %s115, %s117
      %p124 = scmp.eq.s32.totalorder %s23, 1
      %p125 = por %p123, %p124
      %p126 = scmp.ne.s32.totalorder %s117, %s118
      %p127 = scmp.eq.s32.totalorder %s23, 0
      %p128 = por %p126, %p127
      %p129 = scmp.ne.s32.totalorder %s117, %s118
      %p130 = scmp.eq.s32.totalorder %s24, 1
      %p131 = por %p129, %p130
      %p133 = scmp.ne.s32.totalorder %s118, %s132
      %p134 = scmp.eq.s32.totalorder %s24, 0
      %p135 = por %p133, %p134
      %s136 = ssub.s32 %s18, %s25
      %p137 = scmp.eq.s32.totalorder %s136, 0
      %s139 = sadd.s32 %s138, 1
      %s140 = scalar_select %p137, %s138, %s139
      %p143 = pneg %p137
      %p144 = scmp.eq.s32.totalorder %s18, 1
      %p145 = por %p143, %p144
      %p146 = scmp.ne.s32.totalorder %s138, %s141
      %p147 = scmp.eq.s32.totalorder %s18, 0
      %p148 = por %p146, %p147
      %p149 = scmp.ne.s32.totalorder %s138, %s141
      %p150 = scmp.eq.s32.totalorder %s23, 1
      %p151 = por %p149, %p150
      %p152 = scmp.ne.s32.totalorder %s141, %s142
      %p153 = scmp.eq.s32.totalorder %s23, 0
      %p154 = por %p152, %p153
      %p155 = scmp.ne.s32.totalorder %s141, %s142
      %p156 = scmp.eq.s32.totalorder %s24, 1
      %p157 = por %p155, %p156
      %p159 = scmp.ne.s32.totalorder %s142, %s158
      %p160 = scmp.eq.s32.totalorder %s24, 0
      %p161 = por %p159, %p160
      %p162 = scmp.le.s32.totalorder 1, %s18
      %p163 = scmp.lt.s32.totalorder %s18, 3
      %p164 = pnand %p162, %p163
      %p165 = pneg %p164
      // Predicated region
      $region9: #{tpu_custom_call.1} parent=5 // pred_check
        _
      $region10: #{tpu_custom_call.1} parent=5 // pred_check_branch
        %167 = sbr.rel (%p164) target = $region12
      $region11: #{tpu_custom_call.1} parent=5 // pred_region
        %s168 = ssub.s32 %s18, 1
        // Predicated region
        $region13: #{tpu_custom_call.1} parent=11 // pred_check
          %p169 = pneg %p65
        $region14: #{tpu_custom_call.1} parent=11 // pred_check_branch
          %171 = sbr.rel (%p169) target = $region16
        $region15: #{tpu_custom_call.1} parent=11 // pred_region
          %173 = vsyncadd [#allocation6], 0
          %s174 = sshll.u32 %s1, 4
          %s175 = int_to_ptr.hbm [resolvable:$true] %s174
          %s176 = sshll.u32 [#allocation5], 4
          %s177 = int_to_ptr.vmem [resolvable:$true] %s176
          %182 = dma.hbm_to_vmem [thread:$0]  %s175, 2048, %s177, [#allocation6], 128, 128, 8
        $region16: #{tpu_custom_call.1} parent=11 // pred_fallthru
          _
        // Predicated region
        $region17: #{tpu_custom_call.1} parent=11 // pred_check
          %p183 = pneg %p86
        $region18: #{tpu_custom_call.1} parent=11 // pred_check_branch
          %185 = sbr.rel (%p183) target = $region20
        $region19: #{tpu_custom_call.1} parent=11 // pred_region
          _
        $region20: #{tpu_custom_call.1} parent=11 // pred_fallthru
          _
        // Predicated region
        $region21: #{tpu_custom_call.1} parent=11 // pred_check
          %p186 = pneg %p107
        $region22: #{tpu_custom_call.1} parent=11 // pred_check_branch
          %188 = sbr.rel (%p186) target = $region24
        $region23: #{tpu_custom_call.1} parent=11 // pred_region
          _
        $region24: #{tpu_custom_call.1} parent=11 // pred_fallthru
          _
        // Predicated region
        $region25: #{tpu_custom_call.1} parent=11 // pred_check
          %p189 = pneg %p128
        $region26: #{tpu_custom_call.1} parent=11 // pred_check_branch
          %191 = sbr.rel (%p189) target = $region28
        $region27: #{tpu_custom_call.1} parent=11 // pred_region
          _
        $region28: #{tpu_custom_call.1} parent=11 // pred_fallthru
          _
      $region12: #{tpu_custom_call.1} parent=5 // pred_fallthru
        _
      %p192 = scmp.lt.s32.totalorder %s18, 2
      // Predicated region
      $region29: #{tpu_custom_call.1} parent=5 // pred_check
        %p193 = pneg %p192
      $region30: #{tpu_custom_call.1} parent=5 // pred_check_branch
        %195 = sbr.rel (%p193) target = $region32
      $region31: #{tpu_custom_call.1} parent=5 // pred_region
        // Predicated region
        $region33: #{tpu_custom_call.1} parent=31 // pred_check
          %p196 = pneg %p38
        $region34: #{tpu_custom_call.1} parent=31 // pred_check_branch
          %198 = sbr.rel (%p196) target = $region36
        $region35: #{tpu_custom_call.1} parent=31 // pred_region
          %s199 = sand.u32 %s28, 1
          %s200 = scalar_lea.sflag [#allocation3], %s199
          %s201 = sand.u32 %s28, 1
          %s202 = smul.addr %s201, 256
          %s203 = scalar_lea.vmem [#allocation2], %s202
          %s204 = smul.u32 32, %s18
          %206 = vsyncadd %s200, 0
          %s207 = smul.addr %s204, 8
          %s208 = scalar_lea.hbm %s0, %s207
          %s209 = sshll.u32 %s208, 4
          %s210 = int_to_ptr.hbm [resolvable:$true] %s209
          %s211 = sshll.u32 %s203, 4
          %s212 = int_to_ptr.vmem [resolvable:$true] %s211
          %217 = dma.hbm_to_vmem [thread:$0]  %s210, 4096, %s212, %s200, 128, 128, 8
        $region36: #{tpu_custom_call.1} parent=31 // pred_fallthru
          _
      $region32: #{tpu_custom_call.1} parent=5 // pred_fallthru
        _
      %p218 = scmp.le.s32.totalorder 1, %s18
      %p219 = scmp.lt.s32.totalorder %s18, 3
      %p220 = pnand %p218, %p219
      %p221 = pneg %p220
      // Predicated region
      $region37: #{tpu_custom_call.1} parent=5 // pred_check
        _
      $region38: #{tpu_custom_call.1} parent=5 // pred_check_branch
        %223 = sbr.rel (%p220) target = $region40
      $region39: #{tpu_custom_call.1} parent=5 // pred_region
        %s224 = ssub.s32 %s18, 1
        %s225 = sand.u32 %s31, 1
        %s226 = scalar_lea.sflag [#allocation3], %s225
        %s227 = sand.u32 %s31, 1
        %s228 = smul.addr %s227, 256
        %s229 = scalar_lea.vmem [#allocation2], %s228
        // Predicated region
        $region41: #{tpu_custom_call.1} parent=39 // pred_check
          %p230 = pneg %p44
        $region42: #{tpu_custom_call.1} parent=39 // pred_check_branch
          %232 = sbr.rel (%p230) target = $region44
        $region43: #{tpu_custom_call.1} parent=39 // pred_region
          %234 = dma.done %s226, 4096
        $region44: #{tpu_custom_call.1} parent=39 // pred_fallthru
          _
        // Predicated region
        $region45: #{tpu_custom_call.1} parent=39 // pred_check
          %p235 = pneg %p65
        $region46: #{tpu_custom_call.1} parent=39 // pred_check_branch
          %237 = sbr.rel (%p235) target = $region48
        $region47: #{tpu_custom_call.1} parent=39 // pred_region
          %239 = dma.done [#allocation6], 2048
        $region48: #{tpu_custom_call.1} parent=39 // pred_fallthru
          _
        %s240 = sand.u32 %s31, 1
        %s241 = scalar_lea.sflag [#allocation3], %s240
        %s242 = sand.u32 %s31, 1
        %s243 = smul.addr %s242, 256
        %s244 = scalar_lea.vmem [#allocation2], %s243
        %p245 = pneg %p44
        %p246 = pneg %p41
        %p247 = pneg %p65
        %p248 = pneg %p62
        %p249 = pneg %p86
        %p250 = pneg %p83
        %p251 = pneg %p107
        %p252 = pneg %p104
        %p253 = pneg %p128
        %p254 = pneg %p125
        %p255 = pneg %p154
        %p256 = pneg %p151
        %s257 = sand.u32 %s141, 1
        %s258 = scalar_lea.sflag [#allocation4], %s257
        %s259 = sand.u32 %s141, 1
        %s260 = smul.addr %s259, 256
        %s261 = scalar_lea.vmem [#allocation7], %s260
        %s262 = smul.u32 32, %s23
        %s263 = smul.u32 32, %s23
        %v264 = vld [vmem:[%s229] sm:$0xff]
        %v265 = vld [vmem:[%s229 + $0x8] sm:$0xff]
        %v266 = vld [vmem:[%s229 + $0x10] sm:$0xff]
        %v267 = vld [vmem:[%s229 + $0x18] sm:$0xff]
        %v268 = vld [vmem:[%s229 + $0x20] sm:$0xff]
        %v269 = vld [vmem:[%s229 + $0x28] sm:$0xff]
        %v270 = vld [vmem:[%s229 + $0x30] sm:$0xff]
        %v271 = vld [vmem:[%s229 + $0x38] sm:$0xff]
        %v272 = vld [vmem:[%s229 + $0x40] sm:$0xff]
        %v273 = vld [vmem:[%s229 + $0x48] sm:$0xff]
        %v274 = vld [vmem:[%s229 + $0x50] sm:$0xff]
        %v275 = vld [vmem:[%s229 + $0x58] sm:$0xff]
        %v276 = vld [vmem:[%s229 + $0x60] sm:$0xff]
        %v277 = vld [vmem:[%s229 + $0x68] sm:$0xff]
        %v278 = vld [vmem:[%s229 + $0x70] sm:$0xff]
        %v279 = vld [vmem:[%s229 + $0x78] sm:$0xff]
        %v280 = vld [vmem:[%s229 + $0x80] sm:$0xff]
        %v281 = vld [vmem:[%s229 + $0x88] sm:$0xff]
        %v282 = vld [vmem:[%s229 + $0x90] sm:$0xff]
        %v283 = vld [vmem:[%s229 + $0x98] sm:$0xff]
        %v284 = vld [vmem:[%s229 + $0xa0] sm:$0xff]
        %v285 = vld [vmem:[%s229 + $0xa8] sm:$0xff]
        %v286 = vld [vmem:[%s229 + $0xb0] sm:$0xff]
        %v287 = vld [vmem:[%s229 + $0xb8] sm:$0xff]
        %v288 = vld [vmem:[%s229 + $0xc0] sm:$0xff]
        %v289 = vld [vmem:[%s229 + $0xc8] sm:$0xff]
        %v290 = vld [vmem:[%s229 + $0xd0] sm:$0xff]
        %v291 = vld [vmem:[%s229 + $0xd8] sm:$0xff]
        %v292 = vld [vmem:[%s229 + $0xe0] sm:$0xff]
        %v293 = vld [vmem:[%s229 + $0xe8] sm:$0xff]
        %v294 = vld [vmem:[%s229 + $0xf0] sm:$0xff]
        %v295 = vld [vmem:[%s229 + $0xf8] sm:$0xff]
        %296 = vadd.xlane.f32.xlu0 %v264
        %v297 = vpop.xlane.xlu0 %296
        %298 = vadd.xlane.f32.xlu0 %v265
        %v299 = vpop.xlane.xlu0 %298
        %300 = vadd.xlane.f32.xlu0 %v266
        %v301 = vpop.xlane.xlu0 %300
        %302 = vadd.xlane.f32.xlu0 %v267
        %v303 = vpop.xlane.xlu0 %302
        %304 = vadd.xlane.f32.xlu0 %v268
        %v305 = vpop.xlane.xlu0 %304
        %306 = vadd.xlane.f32.xlu0 %v269
        %v307 = vpop.xlane.xlu0 %306
        %308 = vadd.xlane.f32.xlu0 %v270
        %v309 = vpop.xlane.xlu0 %308
        %310 = vadd.xlane.f32.xlu0 %v271
        %v311 = vpop.xlane.xlu0 %310
        %312 = vadd.xlane.f32.xlu0 %v272
        %v313 = vpop.xlane.xlu0 %312
        %314 = vadd.xlane.f32.xlu0 %v273
        %v315 = vpop.xlane.xlu0 %314
        %316 = vadd.xlane.f32.xlu0 %v274
        %v317 = vpop.xlane.xlu0 %316
        %318 = vadd.xlane.f32.xlu0 %v275
        %v319 = vpop.xlane.xlu0 %318
        %320 = vadd.xlane.f32.xlu0 %v276
        %v321 = vpop.xlane.xlu0 %320
        %322 = vadd.xlane.f32.xlu0 %v277
        %v323 = vpop.xlane.xlu0 %322
        %324 = vadd.xlane.f32.xlu0 %v278
        %v325 = vpop.xlane.xlu0 %324
        %326 = vadd.xlane.f32.xlu0 %v279
        %v327 = vpop.xlane.xlu0 %326
        %328 = vadd.xlane.f32.xlu0 %v280
        %v329 = vpop.xlane.xlu0 %328
        %330 = vadd.xlane.f32.xlu0 %v281
        %v331 = vpop.xlane.xlu0 %330
        %332 = vadd.xlane.f32.xlu0 %v282
        %v333 = vpop.xlane.xlu0 %332
        %334 = vadd.xlane.f32.xlu0 %v283
        %v335 = vpop.xlane.xlu0 %334
        %336 = vadd.xlane.f32.xlu0 %v284
        %v337 = vpop.xlane.xlu0 %336
        %338 = vadd.xlane.f32.xlu0 %v285
        %v339 = vpop.xlane.xlu0 %338
        %340 = vadd.xlane.f32.xlu0 %v286
        %v341 = vpop.xlane.xlu0 %340
        %342 = vadd.xlane.f32.xlu0 %v287
        %v343 = vpop.xlane.xlu0 %342
        %344 = vadd.xlane.f32.xlu0 %v288
        %v345 = vpop.xlane.xlu0 %344
        %346 = vadd.xlane.f32.xlu0 %v289
        %v347 = vpop.xlane.xlu0 %346
        %348 = vadd.xlane.f32.xlu0 %v290
        %v349 = vpop.xlane.xlu0 %348
        %350 = vadd.xlane.f32.xlu0 %v291
        %v351 = vpop.xlane.xlu0 %350
        %352 = vadd.xlane.f32.xlu0 %v292
        %v353 = vpop.xlane.xlu0 %352
        %354 = vadd.xlane.f32.xlu0 %v293
        %v355 = vpop.xlane.xlu0 %354
        %356 = vadd.xlane.f32.xlu0 %v294
        %v357 = vpop.xlane.xlu0 %356
        %358 = vadd.xlane.f32.xlu0 %v295
        %v359 = vpop.xlane.xlu0 %358
        %v360 = vmul.f32 %v264, %v264
        %v361 = vmul.f32 %v265, %v265
        %v362 = vmul.f32 %v266, %v266
        %v363 = vmul.f32 %v267, %v267
        %v364 = vmul.f32 %v268, %v268
        %v365 = vmul.f32 %v269, %v269
        %v366 = vmul.f32 %v270, %v270
        %v367 = vmul.f32 %v271, %v271
        %v368 = vmul.f32 %v272, %v272
        %v369 = vmul.f32 %v273, %v273
        %v370 = vmul.f32 %v274, %v274
        %v371 = vmul.f32 %v275, %v275
        %v372 = vmul.f32 %v276, %v276
        %v373 = vmul.f32 %v277, %v277
        %v374 = vmul.f32 %v278, %v278
        %v375 = vmul.f32 %v279, %v279
        %v376 = vmul.f32 %v280, %v280
        %v377 = vmul.f32 %v281, %v281
        %v378 = vmul.f32 %v282, %v282
        %v379 = vmul.f32 %v283, %v283
        %v380 = vmul.f32 %v284, %v284
        %v381 = vmul.f32 %v285, %v285
        %v382 = vmul.f32 %v286, %v286
        %v383 = vmul.f32 %v287, %v287
        %v384 = vmul.f32 %v288, %v288
        %v385 = vmul.f32 %v289, %v289
        %v386 = vmul.f32 %v290, %v290
        %v387 = vmul.f32 %v291, %v291
        %v388 = vmul.f32 %v292, %v292
        %v389 = vmul.f32 %v293, %v293
        %v390 = vmul.f32 %v294, %v294
        %v391 = vmul.f32 %v295, %v295
        %392 = vadd.xlane.f32.xlu0 %v360
        %v393 = vpop.xlane.xlu0 %392
        %394 = vadd.xlane.f32.xlu0 %v361
        %v395 = vpop.xlane.xlu0 %394
        %396 = vadd.xlane.f32.xlu0 %v362
        %v397 = vpop.xlane.xlu0 %396
        %398 = vadd.xlane.f32.xlu0 %v363
        %v399 = vpop.xlane.xlu0 %398
        %400 = vadd.xlane.f32.xlu0 %v364
        %v401 = vpop.xlane.xlu0 %400
        %402 = vadd.xlane.f32.xlu0 %v365
        %v403 = vpop.xlane.xlu0 %402
        %404 = vadd.xlane.f32.xlu0 %v366
        %v405 = vpop.xlane.xlu0 %404
        %406 = vadd.xlane.f32.xlu0 %v367
        %v407 = vpop.xlane.xlu0 %406
        %408 = vadd.xlane.f32.xlu0 %v368
        %v409 = vpop.xlane.xlu0 %408
        %410 = vadd.xlane.f32.xlu0 %v369
        %v411 = vpop.xlane.xlu0 %410
        %412 = vadd.xlane.f32.xlu0 %v370
        %v413 = vpop.xlane.xlu0 %412
        %414 = vadd.xlane.f32.xlu0 %v371
        %v415 = vpop.xlane.xlu0 %414
        %416 = vadd.xlane.f32.xlu0 %v372
        %v417 = vpop.xlane.xlu0 %416
        %418 = vadd.xlane.f32.xlu0 %v373
        %v419 = vpop.xlane.xlu0 %418
        %420 = vadd.xlane.f32.xlu0 %v374
        %v421 = vpop.xlane.xlu0 %420
        %422 = vadd.xlane.f32.xlu0 %v375
        %v423 = vpop.xlane.xlu0 %422
        %424 = vadd.xlane.f32.xlu0 %v376
        %v425 = vpop.xlane.xlu0 %424
        %426 = vadd.xlane.f32.xlu0 %v377
        %v427 = vpop.xlane.xlu0 %426
        %428 = vadd.xlane.f32.xlu0 %v378
        %v429 = vpop.xlane.xlu0 %428
        %430 = vadd.xlane.f32.xlu0 %v379
        %v431 = vpop.xlane.xlu0 %430
        %432 = vadd.xlane.f32.xlu0 %v380
        %v433 = vpop.xlane.xlu0 %432
        %434 = vadd.xlane.f32.xlu0 %v381
        %v435 = vpop.xlane.xlu0 %434
        %436 = vadd.xlane.f32.xlu0 %v382
        %v437 = vpop.xlane.xlu0 %436
        %438 = vadd.xlane.f32.xlu0 %v383
        %v439 = vpop.xlane.xlu0 %438
        %440 = vadd.xlane.f32.xlu0 %v384
        %v441 = vpop.xlane.xlu0 %440
        %442 = vadd.xlane.f32.xlu0 %v385
        %v443 = vpop.xlane.xlu0 %442
        %444 = vadd.xlane.f32.xlu0 %v386
        %v445 = vpop.xlane.xlu0 %444
        %446 = vadd.xlane.f32.xlu0 %v387
        %v447 = vpop.xlane.xlu0 %446
        %448 = vadd.xlane.f32.xlu0 %v388
        %v449 = vpop.xlane.xlu0 %448
        %450 = vadd.xlane.f32.xlu0 %v389
        %v451 = vpop.xlane.xlu0 %450
        %452 = vadd.xlane.f32.xlu0 %v390
        %v453 = vpop.xlane.xlu0 %452
        %454 = vadd.xlane.f32.xlu0 %v391
        %v455 = vpop.xlane.xlu0 %454
        %v456 = vmul.f32 %v297, 0.0078125
        %v457 = vmul.f32 %v299, 0.0078125
        %v458 = vmul.f32 %v301, 0.0078125
        %v459 = vmul.f32 %v303, 0.0078125
        %v460 = vmul.f32 %v305, 0.0078125
        %v461 = vmul.f32 %v307, 0.0078125
        %v462 = vmul.f32 %v309, 0.0078125
        %v463 = vmul.f32 %v311, 0.0078125
        %v464 = vmul.f32 %v313, 0.0078125
        %v465 = vmul.f32 %v315, 0.0078125
        %v466 = vmul.f32 %v317, 0.0078125
        %v467 = vmul.f32 %v319, 0.0078125
        %v468 = vmul.f32 %v321, 0.0078125
        %v469 = vmul.f32 %v323, 0.0078125
        %v470 = vmul.f32 %v325, 0.0078125
        %v471 = vmul.f32 %v327, 0.0078125
        %v472 = vmul.f32 %v329, 0.0078125
        %v473 = vmul.f32 %v331, 0.0078125
        %v474 = vmul.f32 %v333, 0.0078125
        %v475 = vmul.f32 %v335, 0.0078125
        %v476 = vmul.f32 %v337, 0.0078125
        %v477 = vmul.f32 %v339, 0.0078125
        %v478 = vmul.f32 %v341, 0.0078125
        %v479 = vmul.f32 %v343, 0.0078125
        %v480 = vmul.f32 %v345, 0.0078125
        %v481 = vmul.f32 %v347, 0.0078125
        %v482 = vmul.f32 %v349, 0.0078125
        %v483 = vmul.f32 %v351, 0.0078125
        %v484 = vmul.f32 %v353, 0.0078125
        %v485 = vmul.f32 %v355, 0.0078125
        %v486 = vmul.f32 %v357, 0.0078125
        %v487 = vmul.f32 %v359, 0.0078125
        %v488 = vmul.f32 %v456, 128.0
        %v489 = vmul.f32 %v457, 128.0
        %v490 = vmul.f32 %v458, 128.0
        %v491 = vmul.f32 %v459, 128.0
        %v492 = vmul.f32 %v460, 128.0
        %v493 = vmul.f32 %v461, 128.0
        %v494 = vmul.f32 %v462, 128.0
        %v495 = vmul.f32 %v463, 128.0
        %v496 = vmul.f32 %v464, 128.0
        %v497 = vmul.f32 %v465, 128.0
        %v498 = vmul.f32 %v466, 128.0
        %v499 = vmul.f32 %v467, 128.0
        %v500 = vmul.f32 %v468, 128.0
        %v501 = vmul.f32 %v469, 128.0
        %v502 = vmul.f32 %v470, 128.0
        %v503 = vmul.f32 %v471, 128.0
        %v504 = vmul.f32 %v472, 128.0
        %v505 = vmul.f32 %v473, 128.0
        %v506 = vmul.f32 %v474, 128.0
        %v507 = vmul.f32 %v475, 128.0
        %v508 = vmul.f32 %v476, 128.0
        %v509 = vmul.f32 %v477, 128.0
        %v510 = vmul.f32 %v478, 128.0
        %v511 = vmul.f32 %v479, 128.0
        %v512 = vmul.f32 %v480, 128.0
        %v513 = vmul.f32 %v481, 128.0
        %v514 = vmul.f32 %v482, 128.0
        %v515 = vmul.f32 %v483, 128.0
        %v516 = vmul.f32 %v484, 128.0
        %v517 = vmul.f32 %v485, 128.0
        %v518 = vmul.f32 %v486, 128.0
        %v519 = vmul.f32 %v487, 128.0
        %v520 = vmul.f32 %v488, %v456
        %v521 = vmul.f32 %v489, %v457
        %v522 = vmul.f32 %v490, %v458
        %v523 = vmul.f32 %v491, %v459
        %v524 = vmul.f32 %v492, %v460
        %v525 = vmul.f32 %v493, %v461
        %v526 = vmul.f32 %v494, %v462
        %v527 = vmul.f32 %v495, %v463
        %v528 = vmul.f32 %v496, %v464
        %v529 = vmul.f32 %v497, %v465
        %v530 = vmul.f32 %v498, %v466
        %v531 = vmul.f32 %v499, %v467
        %v532 = vmul.f32 %v500, %v468
        %v533 = vmul.f32 %v501, %v469
        %v534 = vmul.f32 %v502, %v470
        %v535 = vmul.f32 %v503, %v471
        %v536 = vmul.f32 %v504, %v472
        %v537 = vmul.f32 %v505, %v473
        %v538 = vmul.f32 %v506, %v474
        %v539 = vmul.f32 %v507, %v475
        %v540 = vmul.f32 %v508, %v476
        %v541 = vmul.f32 %v509, %v477
        %v542 = vmul.f32 %v510, %v478
        %v543 = vmul.f32 %v511, %v479
        %v544 = vmul.f32 %v512, %v480
        %v545 = vmul.f32 %v513, %v481
        %v546 = vmul.f32 %v514, %v482
        %v547 = vmul.f32 %v515, %v483
        %v548 = vmul.f32 %v516, %v484
        %v549 = vmul.f32 %v517, %v485
        %v550 = vmul.f32 %v518, %v486
        %v551 = vmul.f32 %v519, %v487
        %v552 = vsub.f32 %v393, %v520
        %v553 = vsub.f32 %v395, %v521
        %v554 = vsub.f32 %v397, %v522
        %v555 = vsub.f32 %v399, %v523
        %v556 = vsub.f32 %v401, %v524
        %v557 = vsub.f32 %v403, %v525
        %v558 = vsub.f32 %v405, %v526
        %v559 = vsub.f32 %v407, %v527
        %v560 = vsub.f32 %v409, %v528
        %v561 = vsub.f32 %v411, %v529
        %v562 = vsub.f32 %v413, %v530
        %v563 = vsub.f32 %v415, %v531
        %v564 = vsub.f32 %v417, %v532
        %v565 = vsub.f32 %v419, %v533
        %v566 = vsub.f32 %v421, %v534
        %v567 = vsub.f32 %v423, %v535
        %v568 = vsub.f32 %v425, %v536
        %v569 = vsub.f32 %v427, %v537
        %v570 = vsub.f32 %v429, %v538
        %v571 = vsub.f32 %v431, %v539
        %v572 = vsub.f32 %v433, %v540
        %v573 = vsub.f32 %v435, %v541
        %v574 = vsub.f32 %v437, %v542
        %v575 = vsub.f32 %v439, %v543
        %v576 = vsub.f32 %v441, %v544
        %v577 = vsub.f32 %v443, %v545
        %v578 = vsub.f32 %v445, %v546
        %v579 = vsub.f32 %v447, %v547
        %v580 = vsub.f32 %v449, %v548
        %v581 = vsub.f32 %v451, %v549
        %v582 = vsub.f32 %v453, %v550
        %v583 = vsub.f32 %v455, %v551
        %v584 = vmax.f32 %v552, 0.0
        %v585 = vmax.f32 %v553, 0.0
        %v586 = vmax.f32 %v554, 0.0
        %v587 = vmax.f32 %v555, 0.0
        %v588 = vmax.f32 %v556, 0.0
        %v589 = vmax.f32 %v557, 0.0
        %v590 = vmax.f32 %v558, 0.0
        %v591 = vmax.f32 %v559, 0.0
        %v592 = vmax.f32 %v560, 0.0
        %v593 = vmax.f32 %v561, 0.0
        %v594 = vmax.f32 %v562, 0.0
        %v595 = vmax.f32 %v563, 0.0
        %v596 = vmax.f32 %v564, 0.0
        %v597 = vmax.f32 %v565, 0.0
        %v598 = vmax.f32 %v566, 0.0
        %v599 = vmax.f32 %v567, 0.0
        %v600 = vmax.f32 %v568, 0.0
        %v601 = vmax.f32 %v569, 0.0
        %v602 = vmax.f32 %v570, 0.0
        %v603 = vmax.f32 %v571, 0.0
        %v604 = vmax.f32 %v572, 0.0
        %v605 = vmax.f32 %v573, 0.0
        %v606 = vmax.f32 %v574, 0.0
        %v607 = vmax.f32 %v575, 0.0
        %v608 = vmax.f32 %v576, 0.0
        %v609 = vmax.f32 %v577, 0.0
        %v610 = vmax.f32 %v578, 0.0
        %v611 = vmax.f32 %v579, 0.0
        %v612 = vmax.f32 %v580, 0.0
        %v613 = vmax.f32 %v581, 0.0
        %v614 = vmax.f32 %v582, 0.0
        %v615 = vmax.f32 %v583, 0.0
        %v616 = vrcp.pop 127.0
        %v617 = vmul.f32 127.0, %v616
        %v618 = vsub.f32 1.0, %v617
        %v619 = vmul.f32 %v616, %v618
        %v620 = vadd.f32 %v616, %v619
        %vm621 = vweird.f32 %v616
        %v622 = vsel %vm621, %v616, %v620
        %v623 = vmul.f32 %v584, %v622
        %v624 = vmul.f32 %v585, %v622
        %v625 = vmul.f32 %v586, %v622
        %v626 = vmul.f32 %v587, %v622
        %v627 = vmul.f32 %v588, %v622
        %v628 = vmul.f32 %v589, %v622
        %v629 = vmul.f32 %v590, %v622
        %v630 = vmul.f32 %v591, %v622
        %v631 = vmul.f32 %v592, %v622
        %v632 = vmul.f32 %v593, %v622
        %v633 = vmul.f32 %v594, %v622
        %v634 = vmul.f32 %v595, %v622
        %v635 = vmul.f32 %v596, %v622
        %v636 = vmul.f32 %v597, %v622
        %v637 = vmul.f32 %v598, %v622
        %v638 = vmul.f32 %v599, %v622
        %v639 = vmul.f32 %v600, %v622
        %v640 = vmul.f32 %v601, %v622
        %v641 = vmul.f32 %v602, %v622
        %v642 = vmul.f32 %v603, %v622
        %v643 = vmul.f32 %v604, %v622
        %v644 = vmul.f32 %v605, %v622
        %v645 = vmul.f32 %v606, %v622
        %v646 = vmul.f32 %v607, %v622
        %v647 = vmul.f32 %v608, %v622
        %v648 = vmul.f32 %v609, %v622
        %v649 = vmul.f32 %v610, %v622
        %v650 = vmul.f32 %v611, %v622
        %v651 = vmul.f32 %v612, %v622
        %v652 = vmul.f32 %v613, %v622
        %v653 = vmul.f32 %v614, %v622
        %v654 = vmul.f32 %v615, %v622
        %v655 = vrsqrt.pop %v623
        %v656 = vmul.f32 %v655, %v623
        %v657 = vmul.f32 %v656, %v655
        %v658 = vmul.f32 0.5, %v657
        %v659 = vsub.f32 1.5, %v658
        %v660 = vmul.f32 %v655, %v659
        %v661 = vmul.f32 %v623, %v660
        %vm662 = vcmp.eq.f32.partialorder %v623, inf
        %v663 = vsel %vm662, %v623, %v661
        %vm664 = vcmp.eq.f32.partialorder %v623, 0.0
        %v665 = vand.u32 %v623, 2147483648
        %v666 = vsel %vm664, %v665, %v663
        %v667 = vrsqrt.pop %v624
        %v668 = vmul.f32 %v667, %v624
        %v669 = vmul.f32 %v668, %v667
        %v670 = vmul.f32 0.5, %v669
        %v671 = vsub.f32 1.5, %v670
        %v672 = vmul.f32 %v667, %v671
        %v673 = vmul.f32 %v624, %v672
        %vm674 = vcmp.eq.f32.partialorder %v624, inf
        %v675 = vsel %vm674, %v624, %v673
        %vm676 = vcmp.eq.f32.partialorder %v624, 0.0
        %v677 = vand.u32 %v624, 2147483648
        %v678 = vsel %vm676, %v677, %v675
        %v679 = vrsqrt.pop %v625
        %v680 = vmul.f32 %v679, %v625
        %v681 = vmul.f32 %v680, %v679
        %v682 = vmul.f32 0.5, %v681
        %v683 = vsub.f32 1.5, %v682
        %v684 = vmul.f32 %v679, %v683
        %v685 = vmul.f32 %v625, %v684
        %vm686 = vcmp.eq.f32.partialorder %v625, inf
        %v687 = vsel %vm686, %v625, %v685
        %vm688 = vcmp.eq.f32.partialorder %v625, 0.0
        %v689 = vand.u32 %v625, 2147483648
        %v690 = vsel %vm688, %v689, %v687
        %v691 = vrsqrt.pop %v626
        %v692 = vmul.f32 %v691, %v626
        %v693 = vmul.f32 %v692, %v691
        %v694 = vmul.f32 0.5, %v693
        %v695 = vsub.f32 1.5, %v694
        %v696 = vmul.f32 %v691, %v695
        %v697 = vmul.f32 %v626, %v696
        %vm698 = vcmp.eq.f32.partialorder %v626, inf
        %v699 = vsel %vm698, %v626, %v697
        %vm700 = vcmp.eq.f32.partialorder %v626, 0.0
        %v701 = vand.u32 %v626, 2147483648
        %v702 = vsel %vm700, %v701, %v699
        %v703 = vrsqrt.pop %v627
        %v704 = vmul.f32 %v703, %v627
        %v705 = vmul.f32 %v704, %v703
        %v706 = vmul.f32 0.5, %v705
        %v707 = vsub.f32 1.5, %v706
        %v708 = vmul.f32 %v703, %v707
        %v709 = vmul.f32 %v627, %v708
        %vm710 = vcmp.eq.f32.partialorder %v627, inf
        %v711 = vsel %vm710, %v627, %v709
        %vm712 = vcmp.eq.f32.partialorder %v627, 0.0
        %v713 = vand.u32 %v627, 2147483648
        %v714 = vsel %vm712, %v713, %v711
        %v715 = vrsqrt.pop %v628
        %v716 = vmul.f32 %v715, %v628
        %v717 = vmul.f32 %v716, %v715
        %v718 = vmul.f32 0.5, %v717
        %v719 = vsub.f32 1.5, %v718
        %v720 = vmul.f32 %v715, %v719
        %v721 = vmul.f32 %v628, %v720
        %vm722 = vcmp.eq.f32.partialorder %v628, inf
        %v723 = vsel %vm722, %v628, %v721
        %vm724 = vcmp.eq.f32.partialorder %v628, 0.0
        %v725 = vand.u32 %v628, 2147483648
        %v726 = vsel %vm724, %v725, %v723
        %v727 = vrsqrt.pop %v629
        %v728 = vmul.f32 %v727, %v629
        %v729 = vmul.f32 %v728, %v727
        %v730 = vmul.f32 0.5, %v729
        %v731 = vsub.f32 1.5, %v730
        %v732 = vmul.f32 %v727, %v731
        %v733 = vmul.f32 %v629, %v732
        %vm734 = vcmp.eq.f32.partialorder %v629, inf
        %v735 = vsel %vm734, %v629, %v733
        %vm736 = vcmp.eq.f32.partialorder %v629, 0.0
        %v737 = vand.u32 %v629, 2147483648
        %v738 = vsel %vm736, %v737, %v735
        %v739 = vrsqrt.pop %v630
        %v740 = vmul.f32 %v739, %v630
        %v741 = vmul.f32 %v740, %v739
        %v742 = vmul.f32 0.5, %v741
        %v743 = vsub.f32 1.5, %v742
        %v744 = vmul.f32 %v739, %v743
        %v745 = vmul.f32 %v630, %v744
        %vm746 = vcmp.eq.f32.partialorder %v630, inf
        %v747 = vsel %vm746, %v630, %v745
        %vm748 = vcmp.eq.f32.partialorder %v630, 0.0
        %v749 = vand.u32 %v630, 2147483648
        %v750 = vsel %vm748, %v749, %v747
        %v751 = vrsqrt.pop %v631
        %v752 = vmul.f32 %v751, %v631
        %v753 = vmul.f32 %v752, %v751
        %v754 = vmul.f32 0.5, %v753
        %v755 = vsub.f32 1.5, %v754
        %v756 = vmul.f32 %v751, %v755
        %v757 = vmul.f32 %v631, %v756
        %vm758 = vcmp.eq.f32.partialorder %v631, inf
        %v759 = vsel %vm758, %v631, %v757
        %vm760 = vcmp.eq.f32.partialorder %v631, 0.0
        %v761 = vand.u32 %v631, 2147483648
        %v762 = vsel %vm760, %v761, %v759
        %v763 = vrsqrt.pop %v632
        %v764 = vmul.f32 %v763, %v632
        %v765 = vmul.f32 %v764, %v763
        %v766 = vmul.f32 0.5, %v765
        %v767 = vsub.f32 1.5, %v766
        %v768 = vmul.f32 %v763, %v767
        %v769 = vmul.f32 %v632, %v768
        %vm770 = vcmp.eq.f32.partialorder %v632, inf
        %v771 = vsel %vm770, %v632, %v769
        %vm772 = vcmp.eq.f32.partialorder %v632, 0.0
        %v773 = vand.u32 %v632, 2147483648
        %v774 = vsel %vm772, %v773, %v771
        %v775 = vrsqrt.pop %v633
        %v776 = vmul.f32 %v775, %v633
        %v777 = vmul.f32 %v776, %v775
        %v778 = vmul.f32 0.5, %v777
        %v779 = vsub.f32 1.5, %v778
        %v780 = vmul.f32 %v775, %v779
        %v781 = vmul.f32 %v633, %v780
        %vm782 = vcmp.eq.f32.partialorder %v633, inf
        %v783 = vsel %vm782, %v633, %v781
        %vm784 = vcmp.eq.f32.partialorder %v633, 0.0
        %v785 = vand.u32 %v633, 2147483648
        %v786 = vsel %vm784, %v785, %v783
        %v787 = vrsqrt.pop %v634
        %v788 = vmul.f32 %v787, %v634
        %v789 = vmul.f32 %v788, %v787
        %v790 = vmul.f32 0.5, %v789
        %v791 = vsub.f32 1.5, %v790
        %v792 = vmul.f32 %v787, %v791
        %v793 = vmul.f32 %v634, %v792
        %vm794 = vcmp.eq.f32.partialorder %v634, inf
        %v795 = vsel %vm794, %v634, %v793
        %vm796 = vcmp.eq.f32.partialorder %v634, 0.0
        %v797 = vand.u32 %v634, 2147483648
        %v798 = vsel %vm796, %v797, %v795
        %v799 = vrsqrt.pop %v635
        %v800 = vmul.f32 %v799, %v635
        %v801 = vmul.f32 %v800, %v799
        %v802 = vmul.f32 0.5, %v801
        %v803 = vsub.f32 1.5, %v802
        %v804 = vmul.f32 %v799, %v803
        %v805 = vmul.f32 %v635, %v804
        %vm806 = vcmp.eq.f32.partialorder %v635, inf
        %v807 = vsel %vm806, %v635, %v805
        %vm808 = vcmp.eq.f32.partialorder %v635, 0.0
        %v809 = vand.u32 %v635, 2147483648
        %v810 = vsel %vm808, %v809, %v807
        %v811 = vrsqrt.pop %v636
        %v812 = vmul.f32 %v811, %v636
        %v813 = vmul.f32 %v812, %v811
        %v814 = vmul.f32 0.5, %v813
        %v815 = vsub.f32 1.5, %v814
        %v816 = vmul.f32 %v811, %v815
        %v817 = vmul.f32 %v636, %v816
        %vm818 = vcmp.eq.f32.partialorder %v636, inf
        %v819 = vsel %vm818, %v636, %v817
        %vm820 = vcmp.eq.f32.partialorder %v636, 0.0
        %v821 = vand.u32 %v636, 2147483648
        %v822 = vsel %vm820, %v821, %v819
        %v823 = vrsqrt.pop %v637
        %v824 = vmul.f32 %v823, %v637
        %v825 = vmul.f32 %v824, %v823
        %v826 = vmul.f32 0.5, %v825
        %v827 = vsub.f32 1.5, %v826
        %v828 = vmul.f32 %v823, %v827
        %v829 = vmul.f32 %v637, %v828
        %vm830 = vcmp.eq.f32.partialorder %v637, inf
        %v831 = vsel %vm830, %v637, %v829
        %vm832 = vcmp.eq.f32.partialorder %v637, 0.0
        %v833 = vand.u32 %v637, 2147483648
        %v834 = vsel %vm832, %v833, %v831
        %v835 = vrsqrt.pop %v638
        %v836 = vmul.f32 %v835, %v638
        %v837 = vmul.f32 %v836, %v835
        %v838 = vmul.f32 0.5, %v837
        %v839 = vsub.f32 1.5, %v838
        %v840 = vmul.f32 %v835, %v839
        %v841 = vmul.f32 %v638, %v840
        %vm842 = vcmp.eq.f32.partialorder %v638, inf
        %v843 = vsel %vm842, %v638, %v841
        %vm844 = vcmp.eq.f32.partialorder %v638, 0.0
        %v845 = vand.u32 %v638, 2147483648
        %v846 = vsel %vm844, %v845, %v843
        %v847 = vrsqrt.pop %v639
        %v848 = vmul.f32 %v847, %v639
        %v849 = vmul.f32 %v848, %v847
        %v850 = vmul.f32 0.5, %v849
        %v851 = vsub.f32 1.5, %v850
        %v852 = vmul.f32 %v847, %v851
        %v853 = vmul.f32 %v639, %v852
        %vm854 = vcmp.eq.f32.partialorder %v639, inf
        %v855 = vsel %vm854, %v639, %v853
        %vm856 = vcmp.eq.f32.partialorder %v639, 0.0
        %v857 = vand.u32 %v639, 2147483648
        %v858 = vsel %vm856, %v857, %v855
        %v859 = vrsqrt.pop %v640
        %v860 = vmul.f32 %v859, %v640
        %v861 = vmul.f32 %v860, %v859
        %v862 = vmul.f32 0.5, %v861
        %v863 = vsub.f32 1.5, %v862
        %v864 = vmul.f32 %v859, %v863
        %v865 = vmul.f32 %v640, %v864
        %vm866 = vcmp.eq.f32.partialorder %v640, inf
        %v867 = vsel %vm866, %v640, %v865
        %vm868 = vcmp.eq.f32.partialorder %v640, 0.0
        %v869 = vand.u32 %v640, 2147483648
        %v870 = vsel %vm868, %v869, %v867
        %v871 = vrsqrt.pop %v641
        %v872 = vmul.f32 %v871, %v641
        %v873 = vmul.f32 %v872, %v871
        %v874 = vmul.f32 0.5, %v873
        %v875 = vsub.f32 1.5, %v874
        %v876 = vmul.f32 %v871, %v875
        %v877 = vmul.f32 %v641, %v876
        %vm878 = vcmp.eq.f32.partialorder %v641, inf
        %v879 = vsel %vm878, %v641, %v877
        %vm880 = vcmp.eq.f32.partialorder %v641, 0.0
        %v881 = vand.u32 %v641, 2147483648
        %v882 = vsel %vm880, %v881, %v879
        %v883 = vrsqrt.pop %v642
        %v884 = vmul.f32 %v883, %v642
        %v885 = vmul.f32 %v884, %v883
        %v886 = vmul.f32 0.5, %v885
        %v887 = vsub.f32 1.5, %v886
        %v888 = vmul.f32 %v883, %v887
        %v889 = vmul.f32 %v642, %v888
        %vm890 = vcmp.eq.f32.partialorder %v642, inf
        %v891 = vsel %vm890, %v642, %v889
        %vm892 = vcmp.eq.f32.partialorder %v642, 0.0
        %v893 = vand.u32 %v642, 2147483648
        %v894 = vsel %vm892, %v893, %v891
        %v895 = vrsqrt.pop %v643
        %v896 = vmul.f32 %v895, %v643
        %v897 = vmul.f32 %v896, %v895
        %v898 = vmul.f32 0.5, %v897
        %v899 = vsub.f32 1.5, %v898
        %v900 = vmul.f32 %v895, %v899
        %v901 = vmul.f32 %v643, %v900
        %vm902 = vcmp.eq.f32.partialorder %v643, inf
        %v903 = vsel %vm902, %v643, %v901
        %vm904 = vcmp.eq.f32.partialorder %v643, 0.0
        %v905 = vand.u32 %v643, 2147483648
        %v906 = vsel %vm904, %v905, %v903
        %v907 = vrsqrt.pop %v644
        %v908 = vmul.f32 %v907, %v644
        %v909 = vmul.f32 %v908, %v907
        %v910 = vmul.f32 0.5, %v909
        %v911 = vsub.f32 1.5, %v910
        %v912 = vmul.f32 %v907, %v911
        %v913 = vmul.f32 %v644, %v912
        %vm914 = vcmp.eq.f32.partialorder %v644, inf
        %v915 = vsel %vm914, %v644, %v913
        %vm916 = vcmp.eq.f32.partialorder %v644, 0.0
        %v917 = vand.u32 %v644, 2147483648
        %v918 = vsel %vm916, %v917, %v915
        %v919 = vrsqrt.pop %v645
        %v920 = vmul.f32 %v919, %v645
        %v921 = vmul.f32 %v920, %v919
        %v922 = vmul.f32 0.5, %v921
        %v923 = vsub.f32 1.5, %v922
        %v924 = vmul.f32 %v919, %v923
        %v925 = vmul.f32 %v645, %v924
        %vm926 = vcmp.eq.f32.partialorder %v645, inf
        %v927 = vsel %vm926, %v645, %v925
        %vm928 = vcmp.eq.f32.partialorder %v645, 0.0
        %v929 = vand.u32 %v645, 2147483648
        %v930 = vsel %vm928, %v929, %v927
        %v931 = vrsqrt.pop %v646
        %v932 = vmul.f32 %v931, %v646
        %v933 = vmul.f32 %v932, %v931
        %v934 = vmul.f32 0.5, %v933
        %v935 = vsub.f32 1.5, %v934
        %v936 = vmul.f32 %v931, %v935
        %v937 = vmul.f32 %v646, %v936
        %vm938 = vcmp.eq.f32.partialorder %v646, inf
        %v939 = vsel %vm938, %v646, %v937
        %vm940 = vcmp.eq.f32.partialorder %v646, 0.0
        %v941 = vand.u32 %v646, 2147483648
        %v942 = vsel %vm940, %v941, %v939
        %v943 = vrsqrt.pop %v647
        %v944 = vmul.f32 %v943, %v647
        %v945 = vmul.f32 %v944, %v943
        %v946 = vmul.f32 0.5, %v945
        %v947 = vsub.f32 1.5, %v946
        %v948 = vmul.f32 %v943, %v947
        %v949 = vmul.f32 %v647, %v948
        %vm950 = vcmp.eq.f32.partialorder %v647, inf
        %v951 = vsel %vm950, %v647, %v949
        %vm952 = vcmp.eq.f32.partialorder %v647, 0.0
        %v953 = vand.u32 %v647, 2147483648
        %v954 = vsel %vm952, %v953, %v951
        %v955 = vrsqrt.pop %v648
        %v956 = vmul.f32 %v955, %v648
        %v957 = vmul.f32 %v956, %v955
        %v958 = vmul.f32 0.5, %v957
        %v959 = vsub.f32 1.5, %v958
        %v960 = vmul.f32 %v955, %v959
        %v961 = vmul.f32 %v648, %v960
        %vm962 = vcmp.eq.f32.partialorder %v648, inf
        %v963 = vsel %vm962, %v648, %v961
        %vm964 = vcmp.eq.f32.partialorder %v648, 0.0
        %v965 = vand.u32 %v648, 2147483648
        %v966 = vsel %vm964, %v965, %v963
        %v967 = vrsqrt.pop %v649
        %v968 = vmul.f32 %v967, %v649
        %v969 = vmul.f32 %v968, %v967
        %v970 = vmul.f32 0.5, %v969
        %v971 = vsub.f32 1.5, %v970
        %v972 = vmul.f32 %v967, %v971
        %v973 = vmul.f32 %v649, %v972
        %vm974 = vcmp.eq.f32.partialorder %v649, inf
        %v975 = vsel %vm974, %v649, %v973
        %vm976 = vcmp.eq.f32.partialorder %v649, 0.0
        %v977 = vand.u32 %v649, 2147483648
        %v978 = vsel %vm976, %v977, %v975
        %v979 = vrsqrt.pop %v650
        %v980 = vmul.f32 %v979, %v650
        %v981 = vmul.f32 %v980, %v979
        %v982 = vmul.f32 0.5, %v981
        %v983 = vsub.f32 1.5, %v982
        %v984 = vmul.f32 %v979, %v983
        %v985 = vmul.f32 %v650, %v984
        %vm986 = vcmp.eq.f32.partialorder %v650, inf
        %v987 = vsel %vm986, %v650, %v985
        %vm988 = vcmp.eq.f32.partialorder %v650, 0.0
        %v989 = vand.u32 %v650, 2147483648
        %v990 = vsel %vm988, %v989, %v987
        %v991 = vrsqrt.pop %v651
        %v992 = vmul.f32 %v991, %v651
        %v993 = vmul.f32 %v992, %v991
        %v994 = vmul.f32 0.5, %v993
        %v995 = vsub.f32 1.5, %v994
        %v996 = vmul.f32 %v991, %v995
        %v997 = vmul.f32 %v651, %v996
        %vm998 = vcmp.eq.f32.partialorder %v651, inf
        %v999 = vsel %vm998, %v651, %v997
        %vm1000 = vcmp.eq.f32.partialorder %v651, 0.0
        %v1001 = vand.u32 %v651, 2147483648
        %v1002 = vsel %vm1000, %v1001, %v999
        %v1003 = vrsqrt.pop %v652
        %v1004 = vmul.f32 %v1003, %v652
        %v1005 = vmul.f32 %v1004, %v1003
        %v1006 = vmul.f32 0.5, %v1005
        %v1007 = vsub.f32 1.5, %v1006
        %v1008 = vmul.f32 %v1003, %v1007
        %v1009 = vmul.f32 %v652, %v1008
        %vm1010 = vcmp.eq.f32.partialorder %v652, inf
        %v1011 = vsel %vm1010, %v652, %v1009
        %vm1012 = vcmp.eq.f32.partialorder %v652, 0.0
        %v1013 = vand.u32 %v652, 2147483648
        %v1014 = vsel %vm1012, %v1013, %v1011
        %v1015 = vrsqrt.pop %v653
        %v1016 = vmul.f32 %v1015, %v653
        %v1017 = vmul.f32 %v1016, %v1015
        %v1018 = vmul.f32 0.5, %v1017
        %v1019 = vsub.f32 1.5, %v1018
        %v1020 = vmul.f32 %v1015, %v1019
        %v1021 = vmul.f32 %v653, %v1020
        %vm1022 = vcmp.eq.f32.partialorder %v653, inf
        %v1023 = vsel %vm1022, %v653, %v1021
        %vm1024 = vcmp.eq.f32.partialorder %v653, 0.0
        %v1025 = vand.u32 %v653, 2147483648
        %v1026 = vsel %vm1024, %v1025, %v1023
        %v1027 = vrsqrt.pop %v654
        %v1028 = vmul.f32 %v1027, %v654
        %v1029 = vmul.f32 %v1028, %v1027
        %v1030 = vmul.f32 0.5, %v1029
        %v1031 = vsub.f32 1.5, %v1030
        %v1032 = vmul.f32 %v1027, %v1031
        %v1033 = vmul.f32 %v654, %v1032
        %vm1034 = vcmp.eq.f32.partialorder %v654, inf
        %v1035 = vsel %vm1034, %v654, %v1033
        %vm1036 = vcmp.eq.f32.partialorder %v654, 0.0
        %v1037 = vand.u32 %v654, 2147483648
        %v1038 = vsel %vm1036, %v1037, %v1035
        %v1039 = vadd.f32 %v666, 1e-06
        %v1040 = vadd.f32 %v678, 1e-06
        %v1041 = vadd.f32 %v690, 1e-06
        %v1042 = vadd.f32 %v702, 1e-06
        %v1043 = vadd.f32 %v714, 1e-06
        %v1044 = vadd.f32 %v726, 1e-06
        %v1045 = vadd.f32 %v738, 1e-06
        %v1046 = vadd.f32 %v750, 1e-06
        %v1047 = vadd.f32 %v762, 1e-06
        %v1048 = vadd.f32 %v774, 1e-06
        %v1049 = vadd.f32 %v786, 1e-06
        %v1050 = vadd.f32 %v798, 1e-06
        %v1051 = vadd.f32 %v810, 1e-06
        %v1052 = vadd.f32 %v822, 1e-06
        %v1053 = vadd.f32 %v834, 1e-06
        %v1054 = vadd.f32 %v846, 1e-06
        %v1055 = vadd.f32 %v858, 1e-06
        %v1056 = vadd.f32 %v870, 1e-06
        %v1057 = vadd.f32 %v882, 1e-06
        %v1058 = vadd.f32 %v894, 1e-06
        %v1059 = vadd.f32 %v906, 1e-06
        %v1060 = vadd.f32 %v918, 1e-06
        %v1061 = vadd.f32 %v930, 1e-06
        %v1062 = vadd.f32 %v942, 1e-06
        %v1063 = vadd.f32 %v954, 1e-06
        %v1064 = vadd.f32 %v966, 1e-06
        %v1065 = vadd.f32 %v978, 1e-06
        %v1066 = vadd.f32 %v990, 1e-06
        %v1067 = vadd.f32 %v1002, 1e-06
        %v1068 = vadd.f32 %v1014, 1e-06
        %v1069 = vadd.f32 %v1026, 1e-06
        %v1070 = vadd.f32 %v1038, 1e-06
        %v1071 = vrcp.pop %v1039
        %v1072 = vmul.f32 %v1039, %v1071
        %v1073 = vsub.f32 1.0, %v1072
        %v1074 = vmul.f32 %v1071, %v1073
        %v1075 = vadd.f32 %v1071, %v1074
        %vm1076 = vweird.f32 %v1039
        %vm1077 = vweird.f32 %v1071
        %vm1078 = vmor %vm1076, %vm1077
        %v1079 = vsel %vm1078, %v1071, %v1075
        %v1080 = vand.u32 2147483647, %v1039
        %vm1081 = vcmp.eq.f32.partialorder %v1080, 8.507059e+37
        %v1082 = vand.u32 %v1039, 2147483648
        %v1083 = vor.u32 1.1754944e-38, %v1082
        %v1084 = vsel %vm1081, %v1083, %v1079
        %v1085 = vrcp.pop %v1040
        %v1086 = vmul.f32 %v1040, %v1085
        %v1087 = vsub.f32 1.0, %v1086
        %v1088 = vmul.f32 %v1085, %v1087
        %v1089 = vadd.f32 %v1085, %v1088
        %vm1090 = vweird.f32 %v1040
        %vm1091 = vweird.f32 %v1085
        %vm1092 = vmor %vm1090, %vm1091
        %v1093 = vsel %vm1092, %v1085, %v1089
        %v1094 = vand.u32 2147483647, %v1040
        %vm1095 = vcmp.eq.f32.partialorder %v1094, 8.507059e+37
        %v1096 = vand.u32 %v1040, 2147483648
        %v1097 = vor.u32 1.1754944e-38, %v1096
        %v1098 = vsel %vm1095, %v1097, %v1093
        %v1099 = vrcp.pop %v1041
        %v1100 = vmul.f32 %v1041, %v1099
        %v1101 = vsub.f32 1.0, %v1100
        %v1102 = vmul.f32 %v1099, %v1101
        %v1103 = vadd.f32 %v1099, %v1102
        %vm1104 = vweird.f32 %v1041
        %vm1105 = vweird.f32 %v1099
        %vm1106 = vmor %vm1104, %vm1105
        %v1107 = vsel %vm1106, %v1099, %v1103
        %v1108 = vand.u32 2147483647, %v1041
        %vm1109 = vcmp.eq.f32.partialorder %v1108, 8.507059e+37
        %v1110 = vand.u32 %v1041, 2147483648
        %v1111 = vor.u32 1.1754944e-38, %v1110
        %v1112 = vsel %vm1109, %v1111, %v1107
        %v1113 = vrcp.pop %v1042
        %v1114 = vmul.f32 %v1042, %v1113
        %v1115 = vsub.f32 1.0, %v1114
        %v1116 = vmul.f32 %v1113, %v1115
        %v1117 = vadd.f32 %v1113, %v1116
        %vm1118 = vweird.f32 %v1042
        %vm1119 = vweird.f32 %v1113
        %vm1120 = vmor %vm1118, %vm1119
        %v1121 = vsel %vm1120, %v1113, %v1117
        %v1122 = vand.u32 2147483647, %v1042
        %vm1123 = vcmp.eq.f32.partialorder %v1122, 8.507059e+37
        %v1124 = vand.u32 %v1042, 2147483648
        %v1125 = vor.u32 1.1754944e-38, %v1124
        %v1126 = vsel %vm1123, %v1125, %v1121
        %v1127 = vrcp.pop %v1043
        %v1128 = vmul.f32 %v1043, %v1127
        %v1129 = vsub.f32 1.0, %v1128
        %v1130 = vmul.f32 %v1127, %v1129
        %v1131 = vadd.f32 %v1127, %v1130
        %vm1132 = vweird.f32 %v1043
        %vm1133 = vweird.f32 %v1127
        %vm1134 = vmor %vm1132, %vm1133
        %v1135 = vsel %vm1134, %v1127, %v1131
        %v1136 = vand.u32 2147483647, %v1043
        %vm1137 = vcmp.eq.f32.partialorder %v1136, 8.507059e+37
        %v1138 = vand.u32 %v1043, 2147483648
        %v1139 = vor.u32 1.1754944e-38, %v1138
        %v1140 = vsel %vm1137, %v1139, %v1135
        %v1141 = vrcp.pop %v1044
        %v1142 = vmul.f32 %v1044, %v1141
        %v1143 = vsub.f32 1.0, %v1142
        %v1144 = vmul.f32 %v1141, %v1143
        %v1145 = vadd.f32 %v1141, %v1144
        %vm1146 = vweird.f32 %v1044
        %vm1147 = vweird.f32 %v1141
        %vm1148 = vmor %vm1146, %vm1147
        %v1149 = vsel %vm1148, %v1141, %v1145
        %v1150 = vand.u32 2147483647, %v1044
        %vm1151 = vcmp.eq.f32.partialorder %v1150, 8.507059e+37
        %v1152 = vand.u32 %v1044, 2147483648
        %v1153 = vor.u32 1.1754944e-38, %v1152
        %v1154 = vsel %vm1151, %v1153, %v1149
        %v1155 = vrcp.pop %v1045
        %v1156 = vmul.f32 %v1045, %v1155
        %v1157 = vsub.f32 1.0, %v1156
        %v1158 = vmul.f32 %v1155, %v1157
        %v1159 = vadd.f32 %v1155, %v1158
        %vm1160 = vweird.f32 %v1045
        %vm1161 = vweird.f32 %v1155
        %vm1162 = vmor %vm1160, %vm1161
        %v1163 = vsel %vm1162, %v1155, %v1159
        %v1164 = vand.u32 2147483647, %v1045
        %vm1165 = vcmp.eq.f32.partialorder %v1164, 8.507059e+37
        %v1166 = vand.u32 %v1045, 2147483648
        %v1167 = vor.u32 1.1754944e-38, %v1166
        %v1168 = vsel %vm1165, %v1167, %v1163
        %v1169 = vrcp.pop %v1046
        %v1170 = vmul.f32 %v1046, %v1169
        %v1171 = vsub.f32 1.0, %v1170
        %v1172 = vmul.f32 %v1169, %v1171
        %v1173 = vadd.f32 %v1169, %v1172
        %vm1174 = vweird.f32 %v1046
        %vm1175 = vweird.f32 %v1169
        %vm1176 = vmor %vm1174, %vm1175
        %v1177 = vsel %vm1176, %v1169, %v1173
        %v1178 = vand.u32 2147483647, %v1046
        %vm1179 = vcmp.eq.f32.partialorder %v1178, 8.507059e+37
        %v1180 = vand.u32 %v1046, 2147483648
        %v1181 = vor.u32 1.1754944e-38, %v1180
        %v1182 = vsel %vm1179, %v1181, %v1177
        %v1183 = vrcp.pop %v1047
        %v1184 = vmul.f32 %v1047, %v1183
        %v1185 = vsub.f32 1.0, %v1184
        %v1186 = vmul.f32 %v1183, %v1185
        %v1187 = vadd.f32 %v1183, %v1186
        %vm1188 = vweird.f32 %v1047
        %vm1189 = vweird.f32 %v1183
        %vm1190 = vmor %vm1188, %vm1189
        %v1191 = vsel %vm1190, %v1183, %v1187
        %v1192 = vand.u32 2147483647, %v1047
        %vm1193 = vcmp.eq.f32.partialorder %v1192, 8.507059e+37
        %v1194 = vand.u32 %v1047, 2147483648
        %v1195 = vor.u32 1.1754944e-38, %v1194
        %v1196 = vsel %vm1193, %v1195, %v1191
        %v1197 = vrcp.pop %v1048
        %v1198 = vmul.f32 %v1048, %v1197
        %v1199 = vsub.f32 1.0, %v1198
        %v1200 = vmul.f32 %v1197, %v1199
        %v1201 = vadd.f32 %v1197, %v1200
        %vm1202 = vweird.f32 %v1048
        %vm1203 = vweird.f32 %v1197
        %vm1204 = vmor %vm1202, %vm1203
        %v1205 = vsel %vm1204, %v1197, %v1201
        %v1206 = vand.u32 2147483647, %v1048
        %vm1207 = vcmp.eq.f32.partialorder %v1206, 8.507059e+37
        %v1208 = vand.u32 %v1048, 2147483648
        %v1209 = vor.u32 1.1754944e-38, %v1208
        %v1210 = vsel %vm1207, %v1209, %v1205
        %v1211 = vrcp.pop %v1049
        %v1212 = vmul.f32 %v1049, %v1211
        %v1213 = vsub.f32 1.0, %v1212
        %v1214 = vmul.f32 %v1211, %v1213
        %v1215 = vadd.f32 %v1211, %v1214
        %vm1216 = vweird.f32 %v1049
        %vm1217 = vweird.f32 %v1211
        %vm1218 = vmor %vm1216, %vm1217
        %v1219 = vsel %vm1218, %v1211, %v1215
        %v1220 = vand.u32 2147483647, %v1049
        %vm1221 = vcmp.eq.f32.partialorder %v1220, 8.507059e+37
        %v1222 = vand.u32 %v1049, 2147483648
        %v1223 = vor.u32 1.1754944e-38, %v1222
        %v1224 = vsel %vm1221, %v1223, %v1219
        %v1225 = vrcp.pop %v1050
        %v1226 = vmul.f32 %v1050, %v1225
        %v1227 = vsub.f32 1.0, %v1226
        %v1228 = vmul.f32 %v1225, %v1227
        %v1229 = vadd.f32 %v1225, %v1228
        %vm1230 = vweird.f32 %v1050
        %vm1231 = vweird.f32 %v1225
        %vm1232 = vmor %vm1230, %vm1231
        %v1233 = vsel %vm1232, %v1225, %v1229
        %v1234 = vand.u32 2147483647, %v1050
        %vm1235 = vcmp.eq.f32.partialorder %v1234, 8.507059e+37
        %v1236 = vand.u32 %v1050, 2147483648
        %v1237 = vor.u32 1.1754944e-38, %v1236
        %v1238 = vsel %vm1235, %v1237, %v1233
        %v1239 = vrcp.pop %v1051
        %v1240 = vmul.f32 %v1051, %v1239
        %v1241 = vsub.f32 1.0, %v1240
        %v1242 = vmul.f32 %v1239, %v1241
        %v1243 = vadd.f32 %v1239, %v1242
        %vm1244 = vweird.f32 %v1051
        %vm1245 = vweird.f32 %v1239
        %vm1246 = vmor %vm1244, %vm1245
        %v1247 = vsel %vm1246, %v1239, %v1243
        %v1248 = vand.u32 2147483647, %v1051
        %vm1249 = vcmp.eq.f32.partialorder %v1248, 8.507059e+37
        %v1250 = vand.u32 %v1051, 2147483648
        %v1251 = vor.u32 1.1754944e-38, %v1250
        %v1252 = vsel %vm1249, %v1251, %v1247
        %v1253 = vrcp.pop %v1052
        %v1254 = vmul.f32 %v1052, %v1253
        %v1255 = vsub.f32 1.0, %v1254
        %v1256 = vmul.f32 %v1253, %v1255
        %v1257 = vadd.f32 %v1253, %v1256
        %vm1258 = vweird.f32 %v1052
        %vm1259 = vweird.f32 %v1253
        %vm1260 = vmor %vm1258, %vm1259
        %v1261 = vsel %vm1260, %v1253, %v1257
        %v1262 = vand.u32 2147483647, %v1052
        %vm1263 = vcmp.eq.f32.partialorder %v1262, 8.507059e+37
        %v1264 = vand.u32 %v1052, 2147483648
        %v1265 = vor.u32 1.1754944e-38, %v1264
        %v1266 = vsel %vm1263, %v1265, %v1261
        %v1267 = vrcp.pop %v1053
        %v1268 = vmul.f32 %v1053, %v1267
        %v1269 = vsub.f32 1.0, %v1268
        %v1270 = vmul.f32 %v1267, %v1269
        %v1271 = vadd.f32 %v1267, %v1270
        %vm1272 = vweird.f32 %v1053
        %vm1273 = vweird.f32 %v1267
        %vm1274 = vmor %vm1272, %vm1273
        %v1275 = vsel %vm1274, %v1267, %v1271
        %v1276 = vand.u32 2147483647, %v1053
        %vm1277 = vcmp.eq.f32.partialorder %v1276, 8.507059e+37
        %v1278 = vand.u32 %v1053, 2147483648
        %v1279 = vor.u32 1.1754944e-38, %v1278
        %v1280 = vsel %vm1277, %v1279, %v1275
        %v1281 = vrcp.pop %v1054
        %v1282 = vmul.f32 %v1054, %v1281
        %v1283 = vsub.f32 1.0, %v1282
        %v1284 = vmul.f32 %v1281, %v1283
        %v1285 = vadd.f32 %v1281, %v1284
        %vm1286 = vweird.f32 %v1054
        %vm1287 = vweird.f32 %v1281
        %vm1288 = vmor %vm1286, %vm1287
        %v1289 = vsel %vm1288, %v1281, %v1285
        %v1290 = vand.u32 2147483647, %v1054
        %vm1291 = vcmp.eq.f32.partialorder %v1290, 8.507059e+37
        %v1292 = vand.u32 %v1054, 2147483648
        %v1293 = vor.u32 1.1754944e-38, %v1292
        %v1294 = vsel %vm1291, %v1293, %v1289
        %v1295 = vrcp.pop %v1055
        %v1296 = vmul.f32 %v1055, %v1295
        %v1297 = vsub.f32 1.0, %v1296
        %v1298 = vmul.f32 %v1295, %v1297
        %v1299 = vadd.f32 %v1295, %v1298
        %vm1300 = vweird.f32 %v1055
        %vm1301 = vweird.f32 %v1295
        %vm1302 = vmor %vm1300, %vm1301
        %v1303 = vsel %vm1302, %v1295, %v1299
        %v1304 = vand.u32 2147483647, %v1055
        %vm1305 = vcmp.eq.f32.partialorder %v1304, 8.507059e+37
        %v1306 = vand.u32 %v1055, 2147483648
        %v1307 = vor.u32 1.1754944e-38, %v1306
        %v1308 = vsel %vm1305, %v1307, %v1303
        %v1309 = vrcp.pop %v1056
        %v1310 = vmul.f32 %v1056, %v1309
        %v1311 = vsub.f32 1.0, %v1310
        %v1312 = vmul.f32 %v1309, %v1311
        %v1313 = vadd.f32 %v1309, %v1312
        %vm1314 = vweird.f32 %v1056
        %vm1315 = vweird.f32 %v1309
        %vm1316 = vmor %vm1314, %vm1315
        %v1317 = vsel %vm1316, %v1309, %v1313
        %v1318 = vand.u32 2147483647, %v1056
        %vm1319 = vcmp.eq.f32.partialorder %v1318, 8.507059e+37
        %v1320 = vand.u32 %v1056, 2147483648
        %v1321 = vor.u32 1.1754944e-38, %v1320
        %v1322 = vsel %vm1319, %v1321, %v1317
        %v1323 = vrcp.pop %v1057
        %v1324 = vmul.f32 %v1057, %v1323
        %v1325 = vsub.f32 1.0, %v1324
        %v1326 = vmul.f32 %v1323, %v1325
        %v1327 = vadd.f32 %v1323, %v1326
        %vm1328 = vweird.f32 %v1057
        %vm1329 = vweird.f32 %v1323
        %vm1330 = vmor %vm1328, %vm1329
        %v1331 = vsel %vm1330, %v1323, %v1327
        %v1332 = vand.u32 2147483647, %v1057
        %vm1333 = vcmp.eq.f32.partialorder %v1332, 8.507059e+37
        %v1334 = vand.u32 %v1057, 2147483648
        %v1335 = vor.u32 1.1754944e-38, %v1334
        %v1336 = vsel %vm1333, %v1335, %v1331
        %v1337 = vrcp.pop %v1058
        %v1338 = vmul.f32 %v1058, %v1337
        %v1339 = vsub.f32 1.0, %v1338
        %v1340 = vmul.f32 %v1337, %v1339
        %v1341 = vadd.f32 %v1337, %v1340
        %vm1342 = vweird.f32 %v1058
        %vm1343 = vweird.f32 %v1337
        %vm1344 = vmor %vm1342, %vm1343
        %v1345 = vsel %vm1344, %v1337, %v1341
        %v1346 = vand.u32 2147483647, %v1058
        %vm1347 = vcmp.eq.f32.partialorder %v1346, 8.507059e+37
        %v1348 = vand.u32 %v1058, 2147483648
        %v1349 = vor.u32 1.1754944e-38, %v1348
        %v1350 = vsel %vm1347, %v1349, %v1345
        %v1351 = vrcp.pop %v1059
        %v1352 = vmul.f32 %v1059, %v1351
        %v1353 = vsub.f32 1.0, %v1352
        %v1354 = vmul.f32 %v1351, %v1353
        %v1355 = vadd.f32 %v1351, %v1354
        %vm1356 = vweird.f32 %v1059
        %vm1357 = vweird.f32 %v1351
        %vm1358 = vmor %vm1356, %vm1357
        %v1359 = vsel %vm1358, %v1351, %v1355
        %v1360 = vand.u32 2147483647, %v1059
        %vm1361 = vcmp.eq.f32.partialorder %v1360, 8.507059e+37
        %v1362 = vand.u32 %v1059, 2147483648
        %v1363 = vor.u32 1.1754944e-38, %v1362
        %v1364 = vsel %vm1361, %v1363, %v1359
        %v1365 = vrcp.pop %v1060
        %v1366 = vmul.f32 %v1060, %v1365
        %v1367 = vsub.f32 1.0, %v1366
        %v1368 = vmul.f32 %v1365, %v1367
        %v1369 = vadd.f32 %v1365, %v1368
        %vm1370 = vweird.f32 %v1060
        %vm1371 = vweird.f32 %v1365
        %vm1372 = vmor %vm1370, %vm1371
        %v1373 = vsel %vm1372, %v1365, %v1369
        %v1374 = vand.u32 2147483647, %v1060
        %vm1375 = vcmp.eq.f32.partialorder %v1374, 8.507059e+37
        %v1376 = vand.u32 %v1060, 2147483648
        %v1377 = vor.u32 1.1754944e-38, %v1376
        %v1378 = vsel %vm1375, %v1377, %v1373
        %v1379 = vrcp.pop %v1061
        %v1380 = vmul.f32 %v1061, %v1379
        %v1381 = vsub.f32 1.0, %v1380
        %v1382 = vmul.f32 %v1379, %v1381
        %v1383 = vadd.f32 %v1379, %v1382
        %vm1384 = vweird.f32 %v1061
        %vm1385 = vweird.f32 %v1379
        %vm1386 = vmor %vm1384, %vm1385
        %v1387 = vsel %vm1386, %v1379, %v1383
        %v1388 = vand.u32 2147483647, %v1061
        %vm1389 = vcmp.eq.f32.partialorder %v1388, 8.507059e+37
        %v1390 = vand.u32 %v1061, 2147483648
        %v1391 = vor.u32 1.1754944e-38, %v1390
        %v1392 = vsel %vm1389, %v1391, %v1387
        %v1393 = vrcp.pop %v1062
        %v1394 = vmul.f32 %v1062, %v1393
        %v1395 = vsub.f32 1.0, %v1394
        %v1396 = vmul.f32 %v1393, %v1395
        %v1397 = vadd.f32 %v1393, %v1396
        %vm1398 = vweird.f32 %v1062
        %vm1399 = vweird.f32 %v1393
        %vm1400 = vmor %vm1398, %vm1399
        %v1401 = vsel %vm1400, %v1393, %v1397
        %v1402 = vand.u32 2147483647, %v1062
        %vm1403 = vcmp.eq.f32.partialorder %v1402, 8.507059e+37
        %v1404 = vand.u32 %v1062, 2147483648
        %v1405 = vor.u32 1.1754944e-38, %v1404
        %v1406 = vsel %vm1403, %v1405, %v1401
        %v1407 = vrcp.pop %v1063
        %v1408 = vmul.f32 %v1063, %v1407
        %v1409 = vsub.f32 1.0, %v1408
        %v1410 = vmul.f32 %v1407, %v1409
        %v1411 = vadd.f32 %v1407, %v1410
        %vm1412 = vweird.f32 %v1063
        %vm1413 = vweird.f32 %v1407
        %vm1414 = vmor %vm1412, %vm1413
        %v1415 = vsel %vm1414, %v1407, %v1411
        %v1416 = vand.u32 2147483647, %v1063
        %vm1417 = vcmp.eq.f32.partialorder %v1416, 8.507059e+37
        %v1418 = vand.u32 %v1063, 2147483648
        %v1419 = vor.u32 1.1754944e-38, %v1418
        %v1420 = vsel %vm1417, %v1419, %v1415
        %v1421 = vrcp.pop %v1064
        %v1422 = vmul.f32 %v1064, %v1421
        %v1423 = vsub.f32 1.0, %v1422
        %v1424 = vmul.f32 %v1421, %v1423
        %v1425 = vadd.f32 %v1421, %v1424
        %vm1426 = vweird.f32 %v1064
        %vm1427 = vweird.f32 %v1421
        %vm1428 = vmor %vm1426, %vm1427
        %v1429 = vsel %vm1428, %v1421, %v1425
        %v1430 = vand.u32 2147483647, %v1064
        %vm1431 = vcmp.eq.f32.partialorder %v1430, 8.507059e+37
        %v1432 = vand.u32 %v1064, 2147483648
        %v1433 = vor.u32 1.1754944e-38, %v1432
        %v1434 = vsel %vm1431, %v1433, %v1429
        %v1435 = vrcp.pop %v1065
        %v1436 = vmul.f32 %v1065, %v1435
        %v1437 = vsub.f32 1.0, %v1436
        %v1438 = vmul.f32 %v1435, %v1437
        %v1439 = vadd.f32 %v1435, %v1438
        %vm1440 = vweird.f32 %v1065
        %vm1441 = vweird.f32 %v1435
        %vm1442 = vmor %vm1440, %vm1441
        %v1443 = vsel %vm1442, %v1435, %v1439
        %v1444 = vand.u32 2147483647, %v1065
        %vm1445 = vcmp.eq.f32.partialorder %v1444, 8.507059e+37
        %v1446 = vand.u32 %v1065, 2147483648
        %v1447 = vor.u32 1.1754944e-38, %v1446
        %v1448 = vsel %vm1445, %v1447, %v1443
        %v1449 = vrcp.pop %v1066
        %v1450 = vmul.f32 %v1066, %v1449
        %v1451 = vsub.f32 1.0, %v1450
        %v1452 = vmul.f32 %v1449, %v1451
        %v1453 = vadd.f32 %v1449, %v1452
        %vm1454 = vweird.f32 %v1066
        %vm1455 = vweird.f32 %v1449
        %vm1456 = vmor %vm1454, %vm1455
        %v1457 = vsel %vm1456, %v1449, %v1453
        %v1458 = vand.u32 2147483647, %v1066
        %vm1459 = vcmp.eq.f32.partialorder %v1458, 8.507059e+37
        %v1460 = vand.u32 %v1066, 2147483648
        %v1461 = vor.u32 1.1754944e-38, %v1460
        %v1462 = vsel %vm1459, %v1461, %v1457
        %v1463 = vrcp.pop %v1067
        %v1464 = vmul.f32 %v1067, %v1463
        %v1465 = vsub.f32 1.0, %v1464
        %v1466 = vmul.f32 %v1463, %v1465
        %v1467 = vadd.f32 %v1463, %v1466
        %vm1468 = vweird.f32 %v1067
        %vm1469 = vweird.f32 %v1463
        %vm1470 = vmor %vm1468, %vm1469
        %v1471 = vsel %vm1470, %v1463, %v1467
        %v1472 = vand.u32 2147483647, %v1067
        %vm1473 = vcmp.eq.f32.partialorder %v1472, 8.507059e+37
        %v1474 = vand.u32 %v1067, 2147483648
        %v1475 = vor.u32 1.1754944e-38, %v1474
        %v1476 = vsel %vm1473, %v1475, %v1471
        %v1477 = vrcp.pop %v1068
        %v1478 = vmul.f32 %v1068, %v1477
        %v1479 = vsub.f32 1.0, %v1478
        %v1480 = vmul.f32 %v1477, %v1479
        %v1481 = vadd.f32 %v1477, %v1480
        %vm1482 = vweird.f32 %v1068
        %vm1483 = vweird.f32 %v1477
        %vm1484 = vmor %vm1482, %vm1483
        %v1485 = vsel %vm1484, %v1477, %v1481
        %v1486 = vand.u32 2147483647, %v1068
        %vm1487 = vcmp.eq.f32.partialorder %v1486, 8.507059e+37
        %v1488 = vand.u32 %v1068, 2147483648
        %v1489 = vor.u32 1.1754944e-38, %v1488
        %v1490 = vsel %vm1487, %v1489, %v1485
        %v1491 = vrcp.pop %v1069
        %v1492 = vmul.f32 %v1069, %v1491
        %v1493 = vsub.f32 1.0, %v1492
        %v1494 = vmul.f32 %v1491, %v1493
        %v1495 = vadd.f32 %v1491, %v1494
        %vm1496 = vweird.f32 %v1069
        %vm1497 = vweird.f32 %v1491
        %vm1498 = vmor %vm1496, %vm1497
        %v1499 = vsel %vm1498, %v1491, %v1495
        %v1500 = vand.u32 2147483647, %v1069
        %vm1501 = vcmp.eq.f32.partialorder %v1500, 8.507059e+37
        %v1502 = vand.u32 %v1069, 2147483648
        %v1503 = vor.u32 1.1754944e-38, %v1502
        %v1504 = vsel %vm1501, %v1503, %v1499
        %v1505 = vrcp.pop %v1070
        %v1506 = vmul.f32 %v1070, %v1505
        %v1507 = vsub.f32 1.0, %v1506
        %v1508 = vmul.f32 %v1505, %v1507
        %v1509 = vadd.f32 %v1505, %v1508
        %vm1510 = vweird.f32 %v1070
        %vm1511 = vweird.f32 %v1505
        %vm1512 = vmor %vm1510, %vm1511
        %v1513 = vsel %vm1512, %v1505, %v1509
        %v1514 = vand.u32 2147483647, %v1070
        %vm1515 = vcmp.eq.f32.partialorder %v1514, 8.507059e+37
        %v1516 = vand.u32 %v1070, 2147483648
        %v1517 = vor.u32 1.1754944e-38, %v1516
        %v1518 = vsel %vm1515, %v1517, %v1513
        %v1519 = vsub.f32 %v264, %v456
        %v1520 = vsub.f32 %v265, %v457
        %v1521 = vsub.f32 %v266, %v458
        %v1522 = vsub.f32 %v267, %v459
        %v1523 = vsub.f32 %v268, %v460
        %v1524 = vsub.f32 %v269, %v461
        %v1525 = vsub.f32 %v270, %v462
        %v1526 = vsub.f32 %v271, %v463
        %v1527 = vsub.f32 %v272, %v464
        %v1528 = vsub.f32 %v273, %v465
        %v1529 = vsub.f32 %v274, %v466
        %v1530 = vsub.f32 %v275, %v467
        %v1531 = vsub.f32 %v276, %v468
        %v1532 = vsub.f32 %v277, %v469
        %v1533 = vsub.f32 %v278, %v470
        %v1534 = vsub.f32 %v279, %v471
        %v1535 = vsub.f32 %v280, %v472
        %v1536 = vsub.f32 %v281, %v473
        %v1537 = vsub.f32 %v282, %v474
        %v1538 = vsub.f32 %v283, %v475
        %v1539 = vsub.f32 %v284, %v476
        %v1540 = vsub.f32 %v285, %v477
        %v1541 = vsub.f32 %v286, %v478
        %v1542 = vsub.f32 %v287, %v479
        %v1543 = vsub.f32 %v288, %v480
        %v1544 = vsub.f32 %v289, %v481
        %v1545 = vsub.f32 %v290, %v482
        %v1546 = vsub.f32 %v291, %v483
        %v1547 = vsub.f32 %v292, %v484
        %v1548 = vsub.f32 %v293, %v485
        %v1549 = vsub.f32 %v294, %v486
        %v1550 = vsub.f32 %v295, %v487
        %v1551 = vmul.f32 %v1519, %v1084
        %v1552 = vmul.f32 %v1520, %v1098
        %v1553 = vmul.f32 %v1521, %v1112
        %v1554 = vmul.f32 %v1522, %v1126
        %v1555 = vmul.f32 %v1523, %v1140
        %v1556 = vmul.f32 %v1524, %v1154
        %v1557 = vmul.f32 %v1525, %v1168
        %v1558 = vmul.f32 %v1526, %v1182
        %v1559 = vmul.f32 %v1527, %v1196
        %v1560 = vmul.f32 %v1528, %v1210
        %v1561 = vmul.f32 %v1529, %v1224
        %v1562 = vmul.f32 %v1530, %v1238
        %v1563 = vmul.f32 %v1531, %v1252
        %v1564 = vmul.f32 %v1532, %v1266
        %v1565 = vmul.f32 %v1533, %v1280
        %v1566 = vmul.f32 %v1534, %v1294
        %v1567 = vmul.f32 %v1535, %v1308
        %v1568 = vmul.f32 %v1536, %v1322
        %v1569 = vmul.f32 %v1537, %v1336
        %v1570 = vmul.f32 %v1538, %v1350
        %v1571 = vmul.f32 %v1539, %v1364
        %v1572 = vmul.f32 %v1540, %v1378
        %v1573 = vmul.f32 %v1541, %v1392
        %v1574 = vmul.f32 %v1542, %v1406
        %v1575 = vmul.f32 %v1543, %v1420
        %v1576 = vmul.f32 %v1544, %v1434
        %v1577 = vmul.f32 %v1545, %v1448
        %v1578 = vmul.f32 %v1546, %v1462
        %v1579 = vmul.f32 %v1547, %v1476
        %v1580 = vmul.f32 %v1548, %v1490
        %v1581 = vmul.f32 %v1549, %v1504
        %v1582 = vmul.f32 %v1550, %v1518
        %v1583 = vld [vmem:[%s3] sm:$0x1]
        %v1585 = vperm.slane %v1583, 0
        %v1587 = vmul.f32 %v1551, %v1585
        %v1588 = vmul.f32 %v1552, %v1585
        %v1589 = vmul.f32 %v1553, %v1585
        %v1590 = vmul.f32 %v1554, %v1585
        %v1591 = vmul.f32 %v1555, %v1585
        %v1592 = vmul.f32 %v1556, %v1585
        %v1593 = vmul.f32 %v1557, %v1585
        %v1594 = vmul.f32 %v1558, %v1585
        %v1595 = vmul.f32 %v1559, %v1585
        %v1596 = vmul.f32 %v1560, %v1585
        %v1597 = vmul.f32 %v1561, %v1585
        %v1598 = vmul.f32 %v1562, %v1585
        %v1599 = vmul.f32 %v1563, %v1585
        %v1600 = vmul.f32 %v1564, %v1585
        %v1601 = vmul.f32 %v1565, %v1585
        %v1602 = vmul.f32 %v1566, %v1585
        %v1603 = vmul.f32 %v1567, %v1585
        %v1604 = vmul.f32 %v1568, %v1585
        %v1605 = vmul.f32 %v1569, %v1585
        %v1606 = vmul.f32 %v1570, %v1585
        %v1607 = vmul.f32 %v1571, %v1585
        %v1608 = vmul.f32 %v1572, %v1585
        %v1609 = vmul.f32 %v1573, %v1585
        %v1610 = vmul.f32 %v1574, %v1585
        %v1611 = vmul.f32 %v1575, %v1585
        %v1612 = vmul.f32 %v1576, %v1585
        %v1613 = vmul.f32 %v1577, %v1585
        %v1614 = vmul.f32 %v1578, %v1585
        %v1615 = vmul.f32 %v1579, %v1585
        %v1616 = vmul.f32 %v1580, %v1585
        %v1617 = vmul.f32 %v1581, %v1585
        %v1618 = vmul.f32 %v1582, %v1585
        %v1619 = vld [vmem:[%s4] sm:$0x1]
        %v1621 = vperm.slane %v1619, 0
        %v1623 = vadd.f32 %v1587, %v1621
        %v1624 = vadd.f32 %v1588, %v1621
        %v1625 = vadd.f32 %v1589, %v1621
        %v1626 = vadd.f32 %v1590, %v1621
        %v1627 = vadd.f32 %v1591, %v1621
        %v1628 = vadd.f32 %v1592, %v1621
        %v1629 = vadd.f32 %v1593, %v1621
        %v1630 = vadd.f32 %v1594, %v1621
        %v1631 = vadd.f32 %v1595, %v1621
        %v1632 = vadd.f32 %v1596, %v1621
        %v1633 = vadd.f32 %v1597, %v1621
        %v1634 = vadd.f32 %v1598, %v1621
        %v1635 = vadd.f32 %v1599, %v1621
        %v1636 = vadd.f32 %v1600, %v1621
        %v1637 = vadd.f32 %v1601, %v1621
        %v1638 = vadd.f32 %v1602, %v1621
        %v1639 = vadd.f32 %v1603, %v1621
        %v1640 = vadd.f32 %v1604, %v1621
        %v1641 = vadd.f32 %v1605, %v1621
        %v1642 = vadd.f32 %v1606, %v1621
        %v1643 = vadd.f32 %v1607, %v1621
        %v1644 = vadd.f32 %v1608, %v1621
        %v1645 = vadd.f32 %v1609, %v1621
        %v1646 = vadd.f32 %v1610, %v1621
        %v1647 = vadd.f32 %v1611, %v1621
        %v1648 = vadd.f32 %v1612, %v1621
        %v1649 = vadd.f32 %v1613, %v1621
        %v1650 = vadd.f32 %v1614, %v1621
        %v1651 = vadd.f32 %v1615, %v1621
        %v1652 = vadd.f32 %v1616, %v1621
        %v1653 = vadd.f32 %v1617, %v1621
        %v1654 = vadd.f32 %v1618, %v1621
        %v1655 = vld [vmem:[#allocation5] sm:$0xff]
        %v1656 = vld [vmem:[#allocation5 + $0x8] sm:$0xff]
        %v1657 = vld [vmem:[#allocation5 + $0x10] sm:$0xff]
        %v1658 = vld [vmem:[#allocation5 + $0x18] sm:$0xff]
        %v1659 = vld [vmem:[#allocation5 + $0x20] sm:$0xff]
        %v1660 = vld [vmem:[#allocation5 + $0x28] sm:$0xff]
        %v1661 = vld [vmem:[#allocation5 + $0x30] sm:$0xff]
        %v1662 = vld [vmem:[#allocation5 + $0x38] sm:$0xff]
        %v1663 = vld [vmem:[#allocation5 + $0x40] sm:$0xff]
        %v1664 = vld [vmem:[#allocation5 + $0x48] sm:$0xff]
        %v1665 = vld [vmem:[#allocation5 + $0x50] sm:$0xff]
        %v1666 = vld [vmem:[#allocation5 + $0x58] sm:$0xff]
        %v1667 = vld [vmem:[#allocation5 + $0x60] sm:$0xff]
        %v1668 = vld [vmem:[#allocation5 + $0x68] sm:$0xff]
        %v1669 = vld [vmem:[#allocation5 + $0x70] sm:$0xff]
        %v1670 = vld [vmem:[#allocation5 + $0x78] sm:$0xff]
        %v1671 = vld [vmem:[%s2] sm:$0x1]
        %v1673 = vperm.slane %v1671, 0
        %1675 = vmatpush.msra.mxu0 %v1670
        %1676 = vmatpush.msra.mxu0 %v1669
        %1677 = vmatpush.msra.mxu0 %v1668
        %1678 = vmatpush.msra.mxu0 %v1667
        %1679 = vmatpush.msra.mxu0 %v1666
        %1680 = vmatpush.msra.mxu0 %v1665
        %1681 = vmatpush.msra.mxu0 %v1664
        %1682 = vmatpush.msra.mxu0 %v1663
        %1683 = vmatpush.msra.mxu0 %v1662
        %1684 = vmatpush.msra.mxu0 %v1661
        %1685 = vmatpush.msra.mxu0 %v1660
        %1686 = vmatpush.msra.mxu0 %v1659
        %1687 = vmatpush.msra.mxu0 %v1658
        %1688 = vmatpush.msra.mxu0 %v1657
        %1689 = vmatpush.msra.mxu0 %v1656
        %1690 = vmatpush.msra.mxu0 %v1655
        %1691 = vmatmul.f32.gmra.mxu0 %v1623
        %v1692 = vpop.f32.mrf.mxu0
        %v1693 = vadd.f32 %v1673, %v1692
        %1694 = vmatmul.f32.gmra.mxu0 %v1624
        %v1695 = vpop.f32.mrf.mxu0
        %v1696 = vadd.f32 %v1673, %v1695
        %1697 = vmatmul.f32.gmra.mxu0 %v1625
        %v1698 = vpop.f32.mrf.mxu0
        %v1699 = vadd.f32 %v1673, %v1698
        %1700 = vmatmul.f32.gmra.mxu0 %v1626
        %v1701 = vpop.f32.mrf.mxu0
        %v1702 = vadd.f32 %v1673, %v1701
        %1703 = vmatmul.f32.gmra.mxu0 %v1627
        %v1704 = vpop.f32.mrf.mxu0
        %v1705 = vadd.f32 %v1673, %v1704
        %1706 = vmatmul.f32.gmra.mxu0 %v1628
        %v1707 = vpop.f32.mrf.mxu0
        %v1708 = vadd.f32 %v1673, %v1707
        %1709 = vmatmul.f32.gmra.mxu0 %v1629
        %v1710 = vpop.f32.mrf.mxu0
        %v1711 = vadd.f32 %v1673, %v1710
        %1712 = vmatmul.f32.gmra.mxu0 %v1630
        %v1713 = vpop.f32.mrf.mxu0
        %v1714 = vadd.f32 %v1673, %v1713
        %1715 = vmatmul.f32.gmra.mxu0 %v1631
        %v1716 = vpop.f32.mrf.mxu0
        %v1717 = vadd.f32 %v1673, %v1716
        %1718 = vmatmul.f32.gmra.mxu0 %v1632
        %v1719 = vpop.f32.mrf.mxu0
        %v1720 = vadd.f32 %v1673, %v1719
        %1721 = vmatmul.f32.gmra.mxu0 %v1633
        %v1722 = vpop.f32.mrf.mxu0
        %v1723 = vadd.f32 %v1673, %v1722
        %1724 = vmatmul.f32.gmra.mxu0 %v1634
        %v1725 = vpop.f32.mrf.mxu0
        %v1726 = vadd.f32 %v1673, %v1725
        %1727 = vmatmul.f32.gmra.mxu0 %v1635
        %v1728 = vpop.f32.mrf.mxu0
        %v1729 = vadd.f32 %v1673, %v1728
        %1730 = vmatmul.f32.gmra.mxu0 %v1636
        %v1731 = vpop.f32.mrf.mxu0
        %v1732 = vadd.f32 %v1673, %v1731
        %1733 = vmatmul.f32.gmra.mxu0 %v1637
        %v1734 = vpop.f32.mrf.mxu0
        %v1735 = vadd.f32 %v1673, %v1734
        %1736 = vmatmul.f32.gmra.mxu0 %v1638
        %v1737 = vpop.f32.mrf.mxu0
        %v1738 = vadd.f32 %v1673, %v1737
        %1739 = vmatmul.f32.gmra.mxu0 %v1639
        %v1740 = vpop.f32.mrf.mxu0
        %v1741 = vadd.f32 %v1673, %v1740
        %1742 = vmatmul.f32.gmra.mxu0 %v1640
        %v1743 = vpop.f32.mrf.mxu0
        %v1744 = vadd.f32 %v1673, %v1743
        %1745 = vmatmul.f32.gmra.mxu0 %v1641
        %v1746 = vpop.f32.mrf.mxu0
        %v1747 = vadd.f32 %v1673, %v1746
        %1748 = vmatmul.f32.gmra.mxu0 %v1642
        %v1749 = vpop.f32.mrf.mxu0
        %v1750 = vadd.f32 %v1673, %v1749
        %1751 = vmatmul.f32.gmra.mxu0 %v1643
        %v1752 = vpop.f32.mrf.mxu0
        %v1753 = vadd.f32 %v1673, %v1752
        %1754 = vmatmul.f32.gmra.mxu0 %v1644
        %v1755 = vpop.f32.mrf.mxu0
        %v1756 = vadd.f32 %v1673, %v1755
        %1757 = vmatmul.f32.gmra.mxu0 %v1645
        %v1758 = vpop.f32.mrf.mxu0
        %v1759 = vadd.f32 %v1673, %v1758
        %1760 = vmatmul.f32.gmra.mxu0 %v1646
        %v1761 = vpop.f32.mrf.mxu0
        %v1762 = vadd.f32 %v1673, %v1761
        %1763 = vmatmul.f32.gmra.mxu0 %v1647
        %v1764 = vpop.f32.mrf.mxu0
        %v1765 = vadd.f32 %v1673, %v1764
        %1766 = vmatmul.f32.gmra.mxu0 %v1648
        %v1767 = vpop.f32.mrf.mxu0
        %v1768 = vadd.f32 %v1673, %v1767
        %1769 = vmatmul.f32.gmra.mxu0 %v1649
        %v1770 = vpop.f32.mrf.mxu0
        %v1771 = vadd.f32 %v1673, %v1770
        %1772 = vmatmul.f32.gmra.mxu0 %v1650
        %v1773 = vpop.f32.mrf.mxu0
        %v1774 = vadd.f32 %v1673, %v1773
        %1775 = vmatmul.f32.gmra.mxu0 %v1651
        %v1776 = vpop.f32.mrf.mxu0
        %v1777 = vadd.f32 %v1673, %v1776
        %1778 = vmatmul.f32.gmra.mxu0 %v1652
        %v1779 = vpop.f32.mrf.mxu0
        %v1780 = vadd.f32 %v1673, %v1779
        %1781 = vmatmul.f32.gmra.mxu0 %v1653
        %v1782 = vpop.f32.mrf.mxu0
        %v1783 = vadd.f32 %v1673, %v1782
        %1784 = vmatmul.f32.gmra.mxu0 %v1654
        %v1785 = vpop.f32.mrf.mxu0
        %v1786 = vadd.f32 %v1673, %v1785
        %1787 = vdwg.mxu0
        %v1788 = vadd.f32 %v264, %v1693
        %v1789 = vadd.f32 %v265, %v1696
        %v1790 = vadd.f32 %v266, %v1699
        %v1791 = vadd.f32 %v267, %v1702
        %v1792 = vadd.f32 %v268, %v1705
        %v1793 = vadd.f32 %v269, %v1708
        %v1794 = vadd.f32 %v270, %v1711
        %v1795 = vadd.f32 %v271, %v1714
        %v1796 = vadd.f32 %v272, %v1717
        %v1797 = vadd.f32 %v273, %v1720
        %v1798 = vadd.f32 %v274, %v1723
        %v1799 = vadd.f32 %v275, %v1726
        %v1800 = vadd.f32 %v276, %v1729
        %v1801 = vadd.f32 %v277, %v1732
        %v1802 = vadd.f32 %v278, %v1735
        %v1803 = vadd.f32 %v279, %v1738
        %v1804 = vadd.f32 %v280, %v1741
        %v1805 = vadd.f32 %v281, %v1744
        %v1806 = vadd.f32 %v282, %v1747
        %v1807 = vadd.f32 %v283, %v1750
        %v1808 = vadd.f32 %v284, %v1753
        %v1809 = vadd.f32 %v285, %v1756
        %v1810 = vadd.f32 %v286, %v1759
        %v1811 = vadd.f32 %v287, %v1762
        %v1812 = vadd.f32 %v288, %v1765
        %v1813 = vadd.f32 %v289, %v1768
        %v1814 = vadd.f32 %v290, %v1771
        %v1815 = vadd.f32 %v291, %v1774
        %v1816 = vadd.f32 %v292, %v1777
        %v1817 = vadd.f32 %v293, %v1780
        %v1818 = vadd.f32 %v294, %v1783
        %v1819 = vadd.f32 %v295, %v1786
        %1820 = vst [vmem:[%s261] sm:$0xff] %v1788
        %1821 = vst [vmem:[%s261 + $0x8] sm:$0xff] %v1789
        %1822 = vst [vmem:[%s261 + $0x10] sm:$0xff] %v1790
        %1823 = vst [vmem:[%s261 + $0x18] sm:$0xff] %v1791
        %1824 = vst [vmem:[%s261 + $0x20] sm:$0xff] %v1792
        %1825 = vst [vmem:[%s261 + $0x28] sm:$0xff] %v1793
        %1826 = vst [vmem:[%s261 + $0x30] sm:$0xff] %v1794
        %1827 = vst [vmem:[%s261 + $0x38] sm:$0xff] %v1795
        %1828 = vst [vmem:[%s261 + $0x40] sm:$0xff] %v1796
        %1829 = vst [vmem:[%s261 + $0x48] sm:$0xff] %v1797
        %1830 = vst [vmem:[%s261 + $0x50] sm:$0xff] %v1798
        %1831 = vst [vmem:[%s261 + $0x58] sm:$0xff] %v1799
        %1832 = vst [vmem:[%s261 + $0x60] sm:$0xff] %v1800
        %1833 = vst [vmem:[%s261 + $0x68] sm:$0xff] %v1801
        %1834 = vst [vmem:[%s261 + $0x70] sm:$0xff] %v1802
        %1835 = vst [vmem:[%s261 + $0x78] sm:$0xff] %v1803
        %1836 = vst [vmem:[%s261 + $0x80] sm:$0xff] %v1804
        %1837 = vst [vmem:[%s261 + $0x88] sm:$0xff] %v1805
        %1838 = vst [vmem:[%s261 + $0x90] sm:$0xff] %v1806
        %1839 = vst [vmem:[%s261 + $0x98] sm:$0xff] %v1807
        %1840 = vst [vmem:[%s261 + $0xa0] sm:$0xff] %v1808
        %1841 = vst [vmem:[%s261 + $0xa8] sm:$0xff] %v1809
        %1842 = vst [vmem:[%s261 + $0xb0] sm:$0xff] %v1810
        %1843 = vst [vmem:[%s261 + $0xb8] sm:$0xff] %v1811
        %1844 = vst [vmem:[%s261 + $0xc0] sm:$0xff] %v1812
        %1845 = vst [vmem:[%s261 + $0xc8] sm:$0xff] %v1813
        %1846 = vst [vmem:[%s261 + $0xd0] sm:$0xff] %v1814
        %1847 = vst [vmem:[%s261 + $0xd8] sm:$0xff] %v1815
        %1848 = vst [vmem:[%s261 + $0xe0] sm:$0xff] %v1816
        %1849 = vst [vmem:[%s261 + $0xe8] sm:$0xff] %v1817
        %1850 = vst [vmem:[%s261 + $0xf0] sm:$0xff] %v1818
        %1851 = vst [vmem:[%s261 + $0xf8] sm:$0xff] %v1819
        %s1852 = sand.u32 %s141, 1
        %s1853 = scalar_lea.sflag [#allocation4], %s1852
        %s1854 = sand.u32 %s141, 1
        %s1855 = smul.addr %s1854, 256
        %s1856 = scalar_lea.vmem [#allocation7], %s1855
        // Predicated region
        $region49: #{tpu_custom_call.1} parent=39 // pred_check
          %p1857 = pneg %p151
        $region50: #{tpu_custom_call.1} parent=39 // pred_check_branch
          %1859 = sbr.rel (%p1857) target = $region52
        $region51: #{tpu_custom_call.1} parent=39 // pred_region
          %s1860 = smul.u32 32, %s23
          %1862 = vsyncadd %s1853, 0
          %s1863 = smul.addr %s1860, 8
          %s1864 = scalar_lea.hbm %s5, %s1863
          %s1865 = sshll.u32 %s1856, 4
          %s1866 = int_to_ptr.vmem [resolvable:$true] %s1865
          %s1867 = sshll.u32 %s1864, 4
          %s1868 = int_to_ptr.hbm [resolvable:$true] %s1867
          %1873 = dma.vmem_to_hbm [thread:$0]  %s1866, 4096, %s1868, %s1853, 128, 128, 8
        $region52: #{tpu_custom_call.1} parent=39 // pred_fallthru
          _
      $region40: #{tpu_custom_call.1} parent=5 // pred_fallthru
        _
      %p1874 = scmp.le.s32.totalorder 2, %s18
      // Predicated region
      $region53: #{tpu_custom_call.1} parent=5 // pred_check
        %p1875 = pneg %p1874
      $region54: #{tpu_custom_call.1} parent=5 // pred_check_branch
        %1877 = sbr.rel (%p1875) target = $region56
      $region55: #{tpu_custom_call.1} parent=5 // pred_region
        %s1878 = ssub.s32 %s18, 2
        // Predicated region
        $region57: #{tpu_custom_call.1} parent=55 // pred_check
          %p1879 = pneg %p157
        $region58: #{tpu_custom_call.1} parent=55 // pred_check_branch
          %1881 = sbr.rel (%p1879) target = $region60
        $region59: #{tpu_custom_call.1} parent=55 // pred_region
          %s1882 = sand.u32 %s142, 1
          %s1883 = scalar_lea.sflag [#allocation4], %s1882
          %s1884 = sand.u32 %s142, 1
          %s1885 = smul.addr %s1884, 256
          %s1886 = scalar_lea.vmem [#allocation7], %s1885
          %1888 = dma.done %s1883, 4096
        $region60: #{tpu_custom_call.1} parent=55 // pred_fallthru
          _
      $region56: #{tpu_custom_call.1} parent=5 // pred_fallthru
        _
    $region6: #{tpu_custom_call.1} parent=1 // loop_footer
      %s22 = sadd.s32 1, %s18
    $region7: #{tpu_custom_call.1} parent=1 // loop_footer_branch
      %17 = sbr.rel target = $region3
    $region8: #{tpu_custom_call.1} parent=1 // loop_exit
      _
    %1889 = vsyncpa [#allocation3], 1
    %s1890 = scalar_lea.sflag [#allocation3], 1
    %1891 = vsyncpa %s1890, 1
    %1892 = vsyncpa [#allocation6], 1
    %1893 = vsyncpa [#allocation4], 1
    %s1894 = scalar_lea.sflag [#allocation4], 1
    %1895 = vsyncpa %s1894, 1

</llo_original>
